<compile_context>
chip_gen: v6e
topology: v6e:2x2x1
jax: 0.10.0
libtpu: 0.0.40
codegen_flags: <defaults>
</compile_context>

<pallas_src>
import jax
import jax.numpy as jnp
from jax import lax
from jax.experimental import pallas as pl
from jax.experimental.pallas import tpu as pltpu


def _mish(x, approx=False):
    # mish(x) = x * tanh(softplus(x)); with u = e^x, tanh(log1p(u)) = u(u+2)/(u(u+2)+2).
    # Keeps PyTorch's softplus threshold (x > 20 -> identity), which also guards
    # exp overflow.  approx=True routes the divide to the EUP reciprocal.
    u = jnp.exp(jnp.minimum(x, 20.0))
    n = u * (u + 2.0)
    if approx:
        y = x * (n * pl.reciprocal(n + 2.0, approx=True))
    else:
        y = x * (n / (n + 2.0))
    return jnp.where(x > 20.0, x, y)


# ---------------------------------------------------------------------------
# Kernel 1: streamed per-graph-block part (grid axis is fully parallel).
# ---------------------------------------------------------------------------
def _stream_kernel(s_ref, x_ref, cw1_ref, cw2_ref, row_ref, f1w_ref, bias_ref,
                   h1_ref, sbd_scr, feat_scr):
    BB, N, _ = s_ref.shape
    M, _ = x_ref.shape                       # M = BB * N node rows
    F1 = cw1_ref.shape[-1]
    F2 = cw2_ref.shape[-1]
    J = f1w_ref.shape[-1]

    # Block-diagonal packing of the BB graphs' Chebyshev operators, built in
    # VMEM (no HBM inflation).  Re-zeroed every step so the grid axis has no
    # cross-step dependency and stays megacore-parallel safe.
    sbd_scr[...] = jnp.zeros_like(sbd_scr)
    for b in range(BB):                      # static unroll, BB is small
        sbd_scr[b * N:(b + 1) * N, b * N:(b + 1) * N] = s_ref[b]
    s_bd = sbd_scr[...]                      # (M, M)

    # Packed bias slices (static offsets).
    o1, o2, o3, o4 = 0, F1, F1 + F2, F1 + F2 + 8 * N
    b1 = bias_ref[:, o1:o1 + F1]
    b2 = bias_ref[:, o2:o2 + F2]
    b3 = bias_ref[:, o3:o3 + 8 * N]          # readout bias, pre-tiled per node
    b4 = bias_ref[:, o4:o4 + J]

    def cheb_mish(xin, w_ref, b):
        # ChebConv(K=2): out = T0 @ W0 + T1 @ W1 + b with T0 = x, T1 = S @ x.
        sx = jnp.dot(s_bd, xin, preferred_element_type=jnp.float32)
        y = (jnp.dot(xin, w_ref[0], preferred_element_type=jnp.float32)
             + jnp.dot(sx, w_ref[1], preferred_element_type=jnp.float32) + b)
        return _mish(y, approx=True)

    h = cheb_mish(x_ref[...], cw1_ref, b1)   # (M, F1)
    h = cheb_mish(h, cw2_ref, b2)            # (M, F2)

    # Per-node readout (bias folded into the packed, pre-tiled b3).
    rpre = jnp.dot(h, row_ref[...], preferred_element_type=jnp.float32)  # (M, 8)
    r3 = rpre.reshape(BB, N, 8)              # leading-dim split (layout-safe)

    # Repack to lane-dense per-graph rows (BB, 8*N): N small masked stores.
    # TODO(synk): for large numROI replace the unroll with a fori_loop/reshape.
    for n in range(N):
        feat_scr[:, n * 8:(n + 1) * 8] = r3[:, n, :]
    feat = _mish(feat_scr[...] + b3, approx=True)          # (BB, 8*N) lane-dense

    # fc1 as a single lane-dense dot with K = 8*N.
    h1_ref[...] = jnp.dot(feat, f1w_ref[...],
                          preferred_element_type=jnp.float32) + b4


# ---------------------------------------------------------------------------
# Kernel 2: cross-graph tail (BatchNorm + heads), one tiny block.
# ---------------------------------------------------------------------------
def _tail_kernel(h1_ref, bng_ref, bnb_ref, f2w_ref, f2b_ref,
                 d1w_ref, d1b_ref, d2w_ref, d2b_ref,
                 logits_ref, cls_ref):
    h1 = h1_ref[...]                                        # (B, J)
    mean = jnp.mean(h1, axis=0, keepdims=True)
    var = jnp.mean((h1 - mean) ** 2, axis=0, keepdims=True)  # biased (train mode)
    hn = (h1 - mean) * lax.rsqrt(var + 1e-5)
    mid = _mish(hn * bng_ref[...] + bnb_ref[...], approx=False)   # middle_logits

    logits = jnp.dot(mid, f2w_ref[...],
                     preferred_element_type=jnp.float32) + f2b_ref[...]
    logits_ref[...] = logits.astype(logits_ref.dtype)

    # grad_reverse is the identity in the forward pass.
    dom = jnp.maximum(jnp.dot(mid, d1w_ref[...],
                              preferred_element_type=jnp.float32) + d1b_ref[...], 0.0)
    cls = jnp.dot(dom, d2w_ref[...],
                  preferred_element_type=jnp.float32) + d2b_ref[...]
    cls_ref[...] = cls.astype(cls_ref.dtype)
    # TODO(synk): grad_reverse only flips gradients in backward; forward is identity.


# ---------------------------------------------------------------------------
# Wrapper
# ---------------------------------------------------------------------------
def chebynet_forward(x, s, params):
    """Full ChebyNetR forward; returns (logits, cls_logits)."""
    B, N, Fin = x.shape
    F1 = params["c1_w0"].shape[1]
    F2 = params["c2_w0"].shape[1]
    J = params["fc1_w"].shape[1]              # numROI
    C = params["fc2_w"].shape[1]              # 2
    D = params["dc2_w"].shape[1]              # 6
    assert params["ro_w"].shape == (F2, 8) and params["fc1_w"].shape[0] == 8 * N

    # ---- graphs per step: target >= 512 matmul rows (fills the 256-wide MXU
    # on v6e/v7x and amortizes the ~0.35us/step grid + DMA-descriptor cost),
    # capped by the batch, BlockSpec alignment, and a VMEM byte budget
    # (portable to v7x's 64 MiB physical / 32 MiB scoped VMEM).
    def step_vmem_bytes(bb):
        m = bb * N
        stream = 2 * (bb * N * N + m * Fin) * 4            # double-buffered S + x
        scratch = m * m * 4 + bb * 8 * N * 4               # s_bd + feat repack
        acts = m * (Fin + 2 * max(F1, F2) + 8) * 4         # live intermediates
        consts = (2 * Fin * F1 + 2 * F1 * F2 + F2 * 8 + 8 * N * J
                  + (F1 + F2 + 8 * N + J)) * 4 * 2
        return stream + scratch + acts + consts + 2 * bb * J * 4

    budget = 24 * 1024 * 1024
    target_bb = max(1, -(-512 // N))                        # ceil(512 / N)
    cand = [d for d in range(1, B + 1)
            if B % d == 0 and (d == B or d % 8 == 0)]       # BlockSpec-aligned
    fitting = [d for d in cand if step_vmem_bytes(d) <= budget] or [min(cand)]
    below = [d for d in fitting if d <= target_bb]
    BB = max(below) if below else min(fitting)
    nblk = B // BB
    M = BB * N

    r2 = lambda v: v.reshape(1, -1)
    x_flat = x.reshape(B * N, Fin)
    cw1 = jnp.stack([params["c1_w0"], params["c1_w1"]])     # (2, Fin, F1)
    cw2 = jnp.stack([params["c2_w0"], params["c2_w1"]])     # (2, F1, F2)
    bias_pack = jnp.concatenate([
        params["c1_b"], params["c2_b"],
        jnp.tile(params["ro_b"], N),                        # matches (N*8,) flatten
        params["fc1_b"]]).reshape(1, -1)
    Lb = bias_pack.shape[1]

    h1 = pl.pallas_call(
        _stream_kernel,
        out_shape=jax.ShapeDtypeStruct((B, J), jnp.float32),
        grid_spec=pltpu.PrefetchScalarGridSpec(
            num_scalar_prefetch=0,
            grid=(nblk,),
            in_specs=[
                pl.BlockSpec((BB, N, N), lambda bi: (bi, 0, 0)),     # S
                pl.BlockSpec((M, Fin), lambda bi: (bi, 0)),          # x (node rows)
                pl.BlockSpec((2, Fin, F1), lambda bi: (0, 0, 0)),    # cheb1 W0/W1
                pl.BlockSpec((2, F1, F2), lambda bi: (0, 0, 0)),     # cheb2 W0/W1
                pl.BlockSpec((F2, 8), lambda bi: (0, 0)),            # readout W
                pl.BlockSpec((8 * N, J), lambda bi: (0, 0)),         # fc1 W
                pl.BlockSpec((1, Lb), lambda bi: (0, 0)),            # packed biases
            ],
            out_specs=pl.BlockSpec((BB, J), lambda bi: (bi, 0)),
            scratch_shapes=[
                pltpu.VMEM((M, M), jnp.float32),                     # block-diag S
                pltpu.VMEM((BB, 8 * N), jnp.float32),                # lane-dense feat
            ],
        ),
        compiler_params=pltpu.CompilerParams(
            dimension_semantics=("parallel",),       # no cross-step deps -> megacore OK
            vmem_limit_bytes=32 * 1024 * 1024,
        ),
    )(s, x_flat, cw1, cw2, params["ro_w"], params["fc1_w"], bias_pack)

    # Tiny cross-graph tail: BN (batch stats) + fc2 + domain head, runs once.
    logits, cls_logits = pl.pallas_call(
        _tail_kernel,
        out_shape=(jax.ShapeDtypeStruct((B, C), x.dtype),
                   jax.ShapeDtypeStruct((B, D), x.dtype)),
    )(h1, r2(params["bn_g"]), r2(params["bn_b"]),
      params["fc2_w"], r2(params["fc2_b"]),
      params["dc1_w"], r2(params["dc1_b"]),
      params["dc2_w"], r2(params["dc2_b"]))
    return logits, cls_logits


# ---------------------------------------------------------------------------
# Parameter / operator construction + pure-JAX reference
# ---------------------------------------------------------------------------
def init_params(key, num_roi, emb_ch):
    ks = jax.random.split(key, 16)
    f = lambda k, shp: (0.1 * jax.random.normal(k, shp)).astype(jnp.float32)
    return {
        "c1_w0": f(ks[0], (num_roi, emb_ch[0])),
        "c1_w1": f(ks[1], (num_roi, emb_ch[0])),
        "c1_b":  f(ks[2], (emb_ch[0],)),
        "c2_w0": f(ks[3], (emb_ch[0], emb_ch[1])),
        "c2_w1": f(ks[4], (emb_ch[0], emb_ch[1])),
        "c2_b":  f(ks[5], (emb_ch[1],)),
        "ro_w":  f(ks[6], (emb_ch[1], 8)),
        "ro_b":  f(ks[7], (8,)),
        "fc1_w": f(ks[8], (8 * num_roi, num_roi)),
        "fc1_b": f(ks[9], (num_roi,)),
        "bn_g":  jnp.ones((num_roi,), jnp.float32),
        "bn_b":  jnp.zeros((num_roi,), jnp.float32),
        "fc2_w": f(ks[10], (num_roi, 2)),
        "fc2_b": f(ks[11], (2,)),
        "dc1_w": f(ks[12], (num_roi, 64)),
        "dc1_b": f(ks[13], (64,)),
        "dc2_w": f(ks[14], (64, 6)),
        "dc2_b": f(ks[15], (6,)),
    }


def build_scaled_laplacian(adj):
    """S = 2L/lambda_max - I with lambda_max=2, 'sym' norm -> -D^-1/2 A D^-1/2."""
    deg = adj.sum(-1)
    dinv = jnp.where(deg > 0, 1.0 / jnp.sqrt(deg), 0.0)
    return -(dinv[:, :, None] * adj * dinv[:, None, :])


def reference_forward(x, s, params):
    mish = lambda v: v * jnp.tanh(jax.nn.softplus(v))

    def cheb(v, w0, w1, b):
        return mish(v @ w0 + jnp.einsum("bij,bjf->bif", s, v) @ w1 + b)

    B, N, _ = x.shape
    h = cheb(x, params["c1_w0"], params["c1_w1"], params["c1_b"])
    h = cheb(h, params["c2_w0"], params["c2_w1"], params["c2_b"])
    r = mish(h @ params["ro_w"] + params["ro_b"])
    feat = r.reshape(B, N * 8)
    h1 = feat @ params["fc1_w"] + params["fc1_b"]
    mean = h1.mean(axis=0, keepdims=True)
    var = ((h1 - mean) ** 2).mean(axis=0, keepdims=True)
    mid = mish((h1 - mean) / jnp.sqrt(var + 1e-5) * params["bn_g"] + params["bn_b"])
    logits = mid @ params["fc2_w"] + params["fc2_b"]
    dom = jnp.maximum(mid @ params["dc1_w"] + params["dc1_b"], 0.0)
    cls = dom @ params["dc2_w"] + params["dc2_b"]
    return logits, cls


if __name__ == "__main__":
    B, N = 8, 16                 # batch of 8 graphs, numROI = 16
    emb_ch = (32, 32)

    key = jax.random.PRNGKey(0)
    kx, ka, kp = jax.random.split(key, 3)

    # node features (feature dim = numROI) and dense symmetric weighted adjacency
    x = jax.random.normal(kx, (B, N, N), dtype=jnp.float32)
    a = jax.random.uniform(ka, (B, N, N), dtype=jnp.float32)
    a = 0.5 * (a + jnp.swapaxes(a, -1, -2))
    a = a * (1.0 - jnp.eye(N, dtype=jnp.float32))
    s = build_scaled_laplacian(a)

    params = init_params(kp, N, emb_ch)

    logits, cls_logits = chebynet_forward(x, s, params)
    jax.block_until_ready((logits, cls_logits))

    assert logits.shape == (B, 2) and logits.dtype == jnp.float32
    assert cls_logits.shape == (B, 6) and cls_logits.dtype == jnp.float32
    assert bool(jnp.all(jnp.isfinite(logits))) and bool(jnp.all(jnp.isfinite(cls_logits)))

    with jax.default_matmul_precision("highest"):
        ref_logits, ref_cls = reference_forward(x, s, params)
    err = max(float(jnp.max(jnp.abs(logits - ref_logits))),
              float(jnp.max(jnp.abs(cls_logits - ref_cls))))
    assert err < 2e-2, f"kernel/reference mismatch: {err}"
    print("KERNEL_OK")
</pallas_src>

<mosaic_0001>
module attributes {stable_mosaic.version = 11 : i64} {
  func.func @_stream_kernel(%arg0: i32, %arg1: memref<8x16x16xf32, #tpu.memory_space<vmem>>, %arg2: memref<128x16xf32, #tpu.memory_space<vmem>>, %arg3: memref<2x16x32xf32, #tpu.memory_space<vmem>>, %arg4: memref<2x32x32xf32, #tpu.memory_space<vmem>>, %arg5: memref<32x8xf32, #tpu.memory_space<vmem>>, %arg6: memref<128x16xf32, #tpu.memory_space<vmem>>, %arg7: memref<1x208xf32, #tpu.memory_space<vmem>>, %arg8: memref<8x16xf32, #tpu.memory_space<vmem>>, %arg9: memref<128x128xf32, #tpu.memory_space<vmem>>, %arg10: memref<8x128xf32, #tpu.memory_space<vmem>>) attributes {dimension_semantics = [#tpu.dimension_semantics<parallel>], iteration_bounds = array<i64: 1>, scalar_prefetch = 0 : i64, scratch_operands = 2 : i64, tpu.core_type = #tpu.core_type<tc>, window_params = [{transform_indices = @transform_0, window_bounds = array<i64: 8, 16, 16>}, {transform_indices = @transform_1, window_bounds = array<i64: 128, 16>}, {pipeline_mode = #tpu.pipeline_mode<synchronous>, transform_indices = @transform_2, window_bounds = array<i64: 2, 16, 32>}, {pipeline_mode = #tpu.pipeline_mode<synchronous>, transform_indices = @transform_3, window_bounds = array<i64: 2, 32, 32>}, {pipeline_mode = #tpu.pipeline_mode<synchronous>, transform_indices = @transform_4, window_bounds = array<i64: 32, 8>}, {pipeline_mode = #tpu.pipeline_mode<synchronous>, transform_indices = @transform_5, window_bounds = array<i64: 128, 16>}, {pipeline_mode = #tpu.pipeline_mode<synchronous>, transform_indices = @transform_6, window_bounds = array<i64: 1, 208>}, {transform_indices = @transform_7, window_bounds = array<i64: 8, 16>}]} {
    %cst = arith.constant 0.000000e+00 : f32
    %0 = vector.broadcast %cst : f32 to vector<128x128xf32>
    %c0 = arith.constant 0 : index
    %c0_0 = arith.constant 0 : index
    %1 = vector.load %arg9[%c0, %c0_0] : memref<128x128xf32, #tpu.memory_space<vmem>>, vector<128x128xf32>
    tpu.vector_store %arg9[%c0, %c0_0], %0 {strides = array<i32>} : memref<128x128xf32, #tpu.memory_space<vmem>>, vector<128x128xf32>,
    %c0_1 = arith.constant 0 : index
    %c0_2 = arith.constant 0 : index
    %c0_3 = arith.constant 0 : index
    %2 = vector.load %arg1[%c0_1, %c0_2, %c0_3] : memref<8x16x16xf32, #tpu.memory_space<vmem>>, vector<1x16x16xf32>
    %3 = vector.shape_cast %2 : vector<1x16x16xf32> to vector<16x16xf32>
    %c0_4 = arith.constant 0 : index
    %c0_5 = arith.constant 0 : index
    %4 = vector.load %arg9[%c0_4, %c0_5] : memref<128x128xf32, #tpu.memory_space<vmem>>, vector<16x16xf32>
    tpu.vector_store %arg9[%c0_4, %c0_5], %3 {strides = array<i32>} : memref<128x128xf32, #tpu.memory_space<vmem>>, vector<16x16xf32>,
    %c1 = arith.constant 1 : index
    %c0_6 = arith.constant 0 : index
    %c0_7 = arith.constant 0 : index
    %5 = vector.load %arg1[%c1, %c0_6, %c0_7] : memref<8x16x16xf32, #tpu.memory_space<vmem>>, vector<1x16x16xf32>
    %6 = vector.shape_cast %5 : vector<1x16x16xf32> to vector<16x16xf32>
    %c16 = arith.constant 16 : index
    %c16_8 = arith.constant 16 : index
    %7 = vector.load %arg9[%c16, %c16_8] : memref<128x128xf32, #tpu.memory_space<vmem>>, vector<16x16xf32>
    tpu.vector_store %arg9[%c16, %c16_8], %6 {strides = array<i32>} : memref<128x128xf32, #tpu.memory_space<vmem>>, vector<16x16xf32>,
    %c2 = arith.constant 2 : index
    %c0_9 = arith.constant 0 : index
    %c0_10 = arith.constant 0 : index
    %8 = vector.load %arg1[%c2, %c0_9, %c0_10] : memref<8x16x16xf32, #tpu.memory_space<vmem>>, vector<1x16x16xf32>
    %9 = vector.shape_cast %8 : vector<1x16x16xf32> to vector<16x16xf32>
    %c32 = arith.constant 32 : index
    %c32_11 = arith.constant 32 : index
    %10 = vector.load %arg9[%c32, %c32_11] : memref<128x128xf32, #tpu.memory_space<vmem>>, vector<16x16xf32>
    tpu.vector_store %arg9[%c32, %c32_11], %9 {strides = array<i32>} : memref<128x128xf32, #tpu.memory_space<vmem>>, vector<16x16xf32>,
    %c3 = arith.constant 3 : index
    %c0_12 = arith.constant 0 : index
    %c0_13 = arith.constant 0 : index
    %11 = vector.load %arg1[%c3, %c0_12, %c0_13] : memref<8x16x16xf32, #tpu.memory_space<vmem>>, vector<1x16x16xf32>
    %12 = vector.shape_cast %11 : vector<1x16x16xf32> to vector<16x16xf32>
    %c48 = arith.constant 48 : index
    %c48_14 = arith.constant 48 : index
    %13 = vector.load %arg9[%c48, %c48_14] : memref<128x128xf32, #tpu.memory_space<vmem>>, vector<16x16xf32>
    tpu.vector_store %arg9[%c48, %c48_14], %12 {strides = array<i32>} : memref<128x128xf32, #tpu.memory_space<vmem>>, vector<16x16xf32>,
    %c4 = arith.constant 4 : index
    %c0_15 = arith.constant 0 : index
    %c0_16 = arith.constant 0 : index
    %14 = vector.load %arg1[%c4, %c0_15, %c0_16] : memref<8x16x16xf32, #tpu.memory_space<vmem>>, vector<1x16x16xf32>
    %15 = vector.shape_cast %14 : vector<1x16x16xf32> to vector<16x16xf32>
    %c64 = arith.constant 64 : index
    %c64_17 = arith.constant 64 : index
    %16 = vector.load %arg9[%c64, %c64_17] : memref<128x128xf32, #tpu.memory_space<vmem>>, vector<16x16xf32>
    tpu.vector_store %arg9[%c64, %c64_17], %15 {strides = array<i32>} : memref<128x128xf32, #tpu.memory_space<vmem>>, vector<16x16xf32>,
    %c5 = arith.constant 5 : index
    %c0_18 = arith.constant 0 : index
    %c0_19 = arith.constant 0 : index
    %17 = vector.load %arg1[%c5, %c0_18, %c0_19] : memref<8x16x16xf32, #tpu.memory_space<vmem>>, vector<1x16x16xf32>
    %18 = vector.shape_cast %17 : vector<1x16x16xf32> to vector<16x16xf32>
    %c80 = arith.constant 80 : index
    %c80_20 = arith.constant 80 : index
    %19 = vector.load %arg9[%c80, %c80_20] : memref<128x128xf32, #tpu.memory_space<vmem>>, vector<16x16xf32>
    tpu.vector_store %arg9[%c80, %c80_20], %18 {strides = array<i32>} : memref<128x128xf32, #tpu.memory_space<vmem>>, vector<16x16xf32>,
    %c6 = arith.constant 6 : index
    %c0_21 = arith.constant 0 : index
    %c0_22 = arith.constant 0 : index
    %20 = vector.load %arg1[%c6, %c0_21, %c0_22] : memref<8x16x16xf32, #tpu.memory_space<vmem>>, vector<1x16x16xf32>
    %21 = vector.shape_cast %20 : vector<1x16x16xf32> to vector<16x16xf32>
    %c96 = arith.constant 96 : index
    %c96_23 = arith.constant 96 : index
    %22 = vector.load %arg9[%c96, %c96_23] : memref<128x128xf32, #tpu.memory_space<vmem>>, vector<16x16xf32>
    tpu.vector_store %arg9[%c96, %c96_23], %21 {strides = array<i32>} : memref<128x128xf32, #tpu.memory_space<vmem>>, vector<16x16xf32>,
    %c7 = arith.constant 7 : index
    %c0_24 = arith.constant 0 : index
    %c0_25 = arith.constant 0 : index
    %23 = vector.load %arg1[%c7, %c0_24, %c0_25] : memref<8x16x16xf32, #tpu.memory_space<vmem>>, vector<1x16x16xf32>
    %24 = vector.shape_cast %23 : vector<1x16x16xf32> to vector<16x16xf32>
    %c112 = arith.constant 112 : index
    %c112_26 = arith.constant 112 : index
    %25 = vector.load %arg9[%c112, %c112_26] : memref<128x128xf32, #tpu.memory_space<vmem>>, vector<16x16xf32>
    tpu.vector_store %arg9[%c112, %c112_26], %24 {strides = array<i32>} : memref<128x128xf32, #tpu.memory_space<vmem>>, vector<16x16xf32>,
    %c0_27 = arith.constant 0 : index
    %c0_28 = arith.constant 0 : index
    %26 = vector.load %arg9[%c0_27, %c0_28] : memref<128x128xf32, #tpu.memory_space<vmem>>, vector<128x128xf32>
    %c0_29 = arith.constant 0 : index
    %c0_30 = arith.constant 0 : index
    %27 = vector.load %arg7[%c0_29, %c0_30] : memref<1x208xf32, #tpu.memory_space<vmem>>, vector<1x32xf32>
    %c0_31 = arith.constant 0 : index
    %c32_32 = arith.constant 32 : index
    %28 = vector.load %arg7[%c0_31, %c32_32] : memref<1x208xf32, #tpu.memory_space<vmem>>, vector<1x32xf32>
    %c0_33 = arith.constant 0 : index
    %c64_34 = arith.constant 64 : index
    %29 = vector.load %arg7[%c0_33, %c64_34] : memref<1x208xf32, #tpu.memory_space<vmem>>, vector<1x128xf32>
    %c0_35 = arith.constant 0 : index
    %c192 = arith.constant 192 : index
    %30 = vector.load %arg7[%c0_35, %c192] : memref<1x208xf32, #tpu.memory_space<vmem>>, vector<1x16xf32>
    %c0_36 = arith.constant 0 : index
    %c0_37 = arith.constant 0 : index
    %31 = vector.load %arg2[%c0_36, %c0_37] : memref<128x16xf32, #tpu.memory_space<vmem>>, vector<128x16xf32>
    %cst_38 = arith.constant dense<0.000000e+00> : vector<128x16xf32>
    %32 = tpu.matmul %26, %31, %cst_38 {dimension_numbers = #tpu.dot_dimension_numbers<[1], [0], [0], [1], [0, 0, 1, 1], [], []>} : vector<128x128xf32>, vector<128x16xf32>, vector<128x16xf32> -> vector<128x16xf32>
    %c0_39 = arith.constant 0 : index
    %c0_40 = arith.constant 0 : index
    %c0_41 = arith.constant 0 : index
    %33 = vector.load %arg3[%c0_39, %c0_40, %c0_41] : memref<2x16x32xf32, #tpu.memory_space<vmem>>, vector<1x16x32xf32>
    %34 = vector.shape_cast %33 : vector<1x16x32xf32> to vector<16x32xf32>
    %cst_42 = arith.constant dense<0.000000e+00> : vector<128x32xf32>
    %35 = tpu.matmul %31, %34, %cst_42 {dimension_numbers = #tpu.dot_dimension_numbers<[1], [0], [0], [1], [0, 0, 1, 1], [], []>} : vector<128x16xf32>, vector<16x32xf32>, vector<128x32xf32> -> vector<128x32xf32>
    %c1_43 = arith.constant 1 : index
    %c0_44 = arith.constant 0 : index
    %c0_45 = arith.constant 0 : index
    %36 = vector.load %arg3[%c1_43, %c0_44, %c0_45] : memref<2x16x32xf32, #tpu.memory_space<vmem>>, vector<1x16x32xf32>
    %37 = vector.shape_cast %36 : vector<1x16x32xf32> to vector<16x32xf32>
    %cst_46 = arith.constant dense<0.000000e+00> : vector<128x32xf32>
    %38 = tpu.matmul %32, %37, %cst_46 {dimension_numbers = #tpu.dot_dimension_numbers<[1], [0], [0], [1], [0, 0, 1, 1], [], []>} : vector<128x16xf32>, vector<16x32xf32>, vector<128x32xf32> -> vector<128x32xf32>
    %39 = arith.addf %35, %38 : vector<128x32xf32>
    %40 = vector.broadcast %27 : vector<1x32xf32> to vector<128x32xf32>
    %41 = arith.addf %39, %40 : vector<128x32xf32>
    %cst_47 = arith.constant 2.000000e+01 : f32
    %42 = vector.broadcast %cst_47 : f32 to vector<128x32xf32>
    %43 = arith.minimumf %41, %42 : vector<128x32xf32>
    %44 = math.exp %43 : vector<128x32xf32>
    %cst_48 = arith.constant 2.000000e+00 : f32
    %45 = vector.broadcast %cst_48 : f32 to vector<128x32xf32>
    %46 = arith.addf %44, %45 : vector<128x32xf32>
    %47 = arith.mulf %44, %46 : vector<128x32xf32>
    %cst_49 = arith.constant 2.000000e+00 : f32
    %48 = vector.broadcast %cst_49 : f32 to vector<128x32xf32>
    %49 = arith.addf %47, %48 : vector<128x32xf32>
    %50 = tpu.reciprocal %49 {approx = true} : vector<128x32xf32> -> vector<128x32xf32>
    %51 = arith.mulf %47, %50 : vector<128x32xf32>
    %52 = arith.mulf %41, %51 : vector<128x32xf32>
    %cst_50 = arith.constant 2.000000e+01 : f32
    %53 = vector.broadcast %cst_50 : f32 to vector<128x32xf32>
    %54 = arith.cmpf ogt, %41, %53 : vector<128x32xf32>
    %55 = arith.select %54, %41, %52 : vector<128x32xi1>, vector<128x32xf32>
    %cst_51 = arith.constant dense<0.000000e+00> : vector<128x32xf32>
    %56 = tpu.matmul %26, %55, %cst_51 {dimension_numbers = #tpu.dot_dimension_numbers<[1], [0], [0], [1], [0, 0, 1, 1], [], []>} : vector<128x128xf32>, vector<128x32xf32>, vector<128x32xf32> -> vector<128x32xf32>
    %c0_52 = arith.constant 0 : index
    %c0_53 = arith.constant 0 : index
    %c0_54 = arith.constant 0 : index
    %57 = vector.load %arg4[%c0_52, %c0_53, %c0_54] : memref<2x32x32xf32, #tpu.memory_space<vmem>>, vector<1x32x32xf32>
    %58 = vector.shape_cast %57 : vector<1x32x32xf32> to vector<32x32xf32>
    %cst_55 = arith.constant dense<0.000000e+00> : vector<128x32xf32>
    %59 = tpu.matmul %55, %58, %cst_55 {dimension_numbers = #tpu.dot_dimension_numbers<[1], [0], [0], [1], [0, 0, 1, 1], [], []>} : vector<128x32xf32>, vector<32x32xf32>, vector<128x32xf32> -> vector<128x32xf32>
    %c1_56 = arith.constant 1 : index
    %c0_57 = arith.constant 0 : index
    %c0_58 = arith.constant 0 : index
    %60 = vector.load %arg4[%c1_56, %c0_57, %c0_58] : memref<2x32x32xf32, #tpu.memory_space<vmem>>, vector<1x32x32xf32>
    %61 = vector.shape_cast %60 : vector<1x32x32xf32> to vector<32x32xf32>
    %cst_59 = arith.constant dense<0.000000e+00> : vector<128x32xf32>
    %62 = tpu.matmul %56, %61, %cst_59 {dimension_numbers = #tpu.dot_dimension_numbers<[1], [0], [0], [1], [0, 0, 1, 1], [], []>} : vector<128x32xf32>, vector<32x32xf32>, vector<128x32xf32> -> vector<128x32xf32>
    %63 = arith.addf %59, %62 : vector<128x32xf32>
    %64 = vector.broadcast %28 : vector<1x32xf32> to vector<128x32xf32>
    %65 = arith.addf %63, %64 : vector<128x32xf32>
    %cst_60 = arith.constant 2.000000e+01 : f32
    %66 = vector.broadcast %cst_60 : f32 to vector<128x32xf32>
    %67 = arith.minimumf %65, %66 : vector<128x32xf32>
    %68 = math.exp %67 : vector<128x32xf32>
    %cst_61 = arith.constant 2.000000e+00 : f32
    %69 = vector.broadcast %cst_61 : f32 to vector<128x32xf32>
    %70 = arith.addf %68, %69 : vector<128x32xf32>
    %71 = arith.mulf %68, %70 : vector<128x32xf32>
    %cst_62 = arith.constant 2.000000e+00 : f32
    %72 = vector.broadcast %cst_62 : f32 to vector<128x32xf32>
    %73 = arith.addf %71, %72 : vector<128x32xf32>
    %74 = tpu.reciprocal %73 {approx = true} : vector<128x32xf32> -> vector<128x32xf32>
    %75 = arith.mulf %71, %74 : vector<128x32xf32>
    %76 = arith.mulf %65, %75 : vector<128x32xf32>
    %cst_63 = arith.constant 2.000000e+01 : f32
    %77 = vector.broadcast %cst_63 : f32 to vector<128x32xf32>
    %78 = arith.cmpf ogt, %65, %77 : vector<128x32xf32>
    %79 = arith.select %78, %65, %76 : vector<128x32xi1>, vector<128x32xf32>
    %c0_64 = arith.constant 0 : index
    %c0_65 = arith.constant 0 : index
    %80 = vector.load %arg5[%c0_64, %c0_65] : memref<32x8xf32, #tpu.memory_space<vmem>>, vector<32x8xf32>
    %cst_66 = arith.constant dense<0.000000e+00> : vector<128x8xf32>
    %81 = tpu.matmul %79, %80, %cst_66 {dimension_numbers = #tpu.dot_dimension_numbers<[1], [0], [0], [1], [0, 0, 1, 1], [], []>} : vector<128x32xf32>, vector<32x8xf32>, vector<128x8xf32> -> vector<128x8xf32>
    %82 = vector.shape_cast %81 : vector<128x8xf32> to vector<8x16x8xf32>
    %83 = vector.extract_strided_slice %82 {offsets = [0, 0, 0], sizes = [8, 1, 8], strides = [1, 1, 1]} : vector<8x16x8xf32> to vector<8x1x8xf32>
    %84 = vector.shape_cast %83 : vector<8x1x8xf32> to vector<8x8xf32>
    %c0_67 = arith.constant 0 : index
    %c0_68 = arith.constant 0 : index
    %85 = vector.load %arg10[%c0_67, %c0_68] : memref<8x128xf32, #tpu.memory_space<vmem>>, vector<8x8xf32>
    tpu.vector_store %arg10[%c0_67, %c0_68], %84 {strides = array<i32>} : memref<8x128xf32, #tpu.memory_space<vmem>>, vector<8x8xf32>,
    %86 = vector.extract_strided_slice %82 {offsets = [0, 1, 0], sizes = [8, 1, 8], strides = [1, 1, 1]} : vector<8x16x8xf32> to vector<8x1x8xf32>
    %87 = vector.shape_cast %86 : vector<8x1x8xf32> to vector<8x8xf32>
    %c0_69 = arith.constant 0 : index
    %c8 = arith.constant 8 : index
    %88 = vector.load %arg10[%c0_69, %c8] : memref<8x128xf32, #tpu.memory_space<vmem>>, vector<8x8xf32>
    tpu.vector_store %arg10[%c0_69, %c8], %87 {strides = array<i32>} : memref<8x128xf32, #tpu.memory_space<vmem>>, vector<8x8xf32>,
    %89 = vector.extract_strided_slice %82 {offsets = [0, 2, 0], sizes = [8, 1, 8], strides = [1, 1, 1]} : vector<8x16x8xf32> to vector<8x1x8xf32>
    %90 = vector.shape_cast %89 : vector<8x1x8xf32> to vector<8x8xf32>
    %c0_70 = arith.constant 0 : index
    %c16_71 = arith.constant 16 : index
    %91 = vector.load %arg10[%c0_70, %c16_71] : memref<8x128xf32, #tpu.memory_space<vmem>>, vector<8x8xf32>
    tpu.vector_store %arg10[%c0_70, %c16_71], %90 {strides = array<i32>} : memref<8x128xf32, #tpu.memory_space<vmem>>, vector<8x8xf32>,
    %92 = vector.extract_strided_slice %82 {offsets = [0, 3, 0], sizes = [8, 1, 8], strides = [1, 1, 1]} : vector<8x16x8xf32> to vector<8x1x8xf32>
    %93 = vector.shape_cast %92 : vector<8x1x8xf32> to vector<8x8xf32>
    %c0_72 = arith.constant 0 : index
    %c24 = arith.constant 24 : index
    %94 = vector.load %arg10[%c0_72, %c24] : memref<8x128xf32, #tpu.memory_space<vmem>>, vector<8x8xf32>
    tpu.vector_store %arg10[%c0_72, %c24], %93 {strides = array<i32>} : memref<8x128xf32, #tpu.memory_space<vmem>>, vector<8x8xf32>,
    %95 = vector.extract_strided_slice %82 {offsets = [0, 4, 0], sizes = [8, 1, 8], strides = [1, 1, 1]} : vector<8x16x8xf32> to vector<8x1x8xf32>
    %96 = vector.shape_cast %95 : vector<8x1x8xf32> to vector<8x8xf32>
    %c0_73 = arith.constant 0 : index
    %c32_74 = arith.constant 32 : index
    %97 = vector.load %arg10[%c0_73, %c32_74] : memref<8x128xf32, #tpu.memory_space<vmem>>, vector<8x8xf32>
    tpu.vector_store %arg10[%c0_73, %c32_74], %96 {strides = array<i32>} : memref<8x128xf32, #tpu.memory_space<vmem>>, vector<8x8xf32>,
    %98 = vector.extract_strided_slice %82 {offsets = [0, 5, 0], sizes = [8, 1, 8], strides = [1, 1, 1]} : vector<8x16x8xf32> to vector<8x1x8xf32>
    %99 = vector.shape_cast %98 : vector<8x1x8xf32> to vector<8x8xf32>
    %c0_75 = arith.constant 0 : index
    %c40 = arith.constant 40 : index
    %100 = vector.load %arg10[%c0_75, %c40] : memref<8x128xf32, #tpu.memory_space<vmem>>, vector<8x8xf32>
    tpu.vector_store %arg10[%c0_75, %c40], %99 {strides = array<i32>} : memref<8x128xf32, #tpu.memory_space<vmem>>, vector<8x8xf32>,
    %101 = vector.extract_strided_slice %82 {offsets = [0, 6, 0], sizes = [8, 1, 8], strides = [1, 1, 1]} : vector<8x16x8xf32> to vector<8x1x8xf32>
    %102 = vector.shape_cast %101 : vector<8x1x8xf32> to vector<8x8xf32>
    %c0_76 = arith.constant 0 : index
    %c48_77 = arith.constant 48 : index
    %103 = vector.load %arg10[%c0_76, %c48_77] : memref<8x128xf32, #tpu.memory_space<vmem>>, vector<8x8xf32>
    tpu.vector_store %arg10[%c0_76, %c48_77], %102 {strides = array<i32>} : memref<8x128xf32, #tpu.memory_space<vmem>>, vector<8x8xf32>,
    %104 = vector.extract_strided_slice %82 {offsets = [0, 7, 0], sizes = [8, 1, 8], strides = [1, 1, 1]} : vector<8x16x8xf32> to vector<8x1x8xf32>
    %105 = vector.shape_cast %104 : vector<8x1x8xf32> to vector<8x8xf32>
    %c0_78 = arith.constant 0 : index
    %c56 = arith.constant 56 : index
    %106 = vector.load %arg10[%c0_78, %c56] : memref<8x128xf32, #tpu.memory_space<vmem>>, vector<8x8xf32>
    tpu.vector_store %arg10[%c0_78, %c56], %105 {strides = array<i32>} : memref<8x128xf32, #tpu.memory_space<vmem>>, vector<8x8xf32>,
    %107 = vector.extract_strided_slice %82 {offsets = [0, 8, 0], sizes = [8, 1, 8], strides = [1, 1, 1]} : vector<8x16x8xf32> to vector<8x1x8xf32>
    %108 = vector.shape_cast %107 : vector<8x1x8xf32> to vector<8x8xf32>
    %c0_79 = arith.constant 0 : index
    %c64_80 = arith.constant 64 : index
    %109 = vector.load %arg10[%c0_79, %c64_80] : memref<8x128xf32, #tpu.memory_space<vmem>>, vector<8x8xf32>
    tpu.vector_store %arg10[%c0_79, %c64_80], %108 {strides = array<i32>} : memref<8x128xf32, #tpu.memory_space<vmem>>, vector<8x8xf32>,
    %110 = vector.extract_strided_slice %82 {offsets = [0, 9, 0], sizes = [8, 1, 8], strides = [1, 1, 1]} : vector<8x16x8xf32> to vector<8x1x8xf32>
    %111 = vector.shape_cast %110 : vector<8x1x8xf32> to vector<8x8xf32>
    %c0_81 = arith.constant 0 : index
    %c72 = arith.constant 72 : index
    %112 = vector.load %arg10[%c0_81, %c72] : memref<8x128xf32, #tpu.memory_space<vmem>>, vector<8x8xf32>
    tpu.vector_store %arg10[%c0_81, %c72], %111 {strides = array<i32>} : memref<8x128xf32, #tpu.memory_space<vmem>>, vector<8x8xf32>,
    %113 = vector.extract_strided_slice %82 {offsets = [0, 10, 0], sizes = [8, 1, 8], strides = [1, 1, 1]} : vector<8x16x8xf32> to vector<8x1x8xf32>
    %114 = vector.shape_cast %113 : vector<8x1x8xf32> to vector<8x8xf32>
    %c0_82 = arith.constant 0 : index
    %c80_83 = arith.constant 80 : index
    %115 = vector.load %arg10[%c0_82, %c80_83] : memref<8x128xf32, #tpu.memory_space<vmem>>, vector<8x8xf32>
    tpu.vector_store %arg10[%c0_82, %c80_83], %114 {strides = array<i32>} : memref<8x128xf32, #tpu.memory_space<vmem>>, vector<8x8xf32>,
    %116 = vector.extract_strided_slice %82 {offsets = [0, 11, 0], sizes = [8, 1, 8], strides = [1, 1, 1]} : vector<8x16x8xf32> to vector<8x1x8xf32>
    %117 = vector.shape_cast %116 : vector<8x1x8xf32> to vector<8x8xf32>
    %c0_84 = arith.constant 0 : index
    %c88 = arith.constant 88 : index
    %118 = vector.load %arg10[%c0_84, %c88] : memref<8x128xf32, #tpu.memory_space<vmem>>, vector<8x8xf32>
    tpu.vector_store %arg10[%c0_84, %c88], %117 {strides = array<i32>} : memref<8x128xf32, #tpu.memory_space<vmem>>, vector<8x8xf32>,
    %119 = vector.extract_strided_slice %82 {offsets = [0, 12, 0], sizes = [8, 1, 8], strides = [1, 1, 1]} : vector<8x16x8xf32> to vector<8x1x8xf32>
    %120 = vector.shape_cast %119 : vector<8x1x8xf32> to vector<8x8xf32>
    %c0_85 = arith.constant 0 : index
    %c96_86 = arith.constant 96 : index
    %121 = vector.load %arg10[%c0_85, %c96_86] : memref<8x128xf32, #tpu.memory_space<vmem>>, vector<8x8xf32>
    tpu.vector_store %arg10[%c0_85, %c96_86], %120 {strides = array<i32>} : memref<8x128xf32, #tpu.memory_space<vmem>>, vector<8x8xf32>,
    %122 = vector.extract_strided_slice %82 {offsets = [0, 13, 0], sizes = [8, 1, 8], strides = [1, 1, 1]} : vector<8x16x8xf32> to vector<8x1x8xf32>
    %123 = vector.shape_cast %122 : vector<8x1x8xf32> to vector<8x8xf32>
    %c0_87 = arith.constant 0 : index
    %c104 = arith.constant 104 : index
    %124 = vector.load %arg10[%c0_87, %c104] : memref<8x128xf32, #tpu.memory_space<vmem>>, vector<8x8xf32>
    tpu.vector_store %arg10[%c0_87, %c104], %123 {strides = array<i32>} : memref<8x128xf32, #tpu.memory_space<vmem>>, vector<8x8xf32>,
    %125 = vector.extract_strided_slice %82 {offsets = [0, 14, 0], sizes = [8, 1, 8], strides = [1, 1, 1]} : vector<8x16x8xf32> to vector<8x1x8xf32>
    %126 = vector.shape_cast %125 : vector<8x1x8xf32> to vector<8x8xf32>
    %c0_88 = arith.constant 0 : index
    %c112_89 = arith.constant 112 : index
    %127 = vector.load %arg10[%c0_88, %c112_89] : memref<8x128xf32, #tpu.memory_space<vmem>>, vector<8x8xf32>
    tpu.vector_store %arg10[%c0_88, %c112_89], %126 {strides = array<i32>} : memref<8x128xf32, #tpu.memory_space<vmem>>, vector<8x8xf32>,
    %128 = vector.extract_strided_slice %82 {offsets = [0, 15, 0], sizes = [8, 1, 8], strides = [1, 1, 1]} : vector<8x16x8xf32> to vector<8x1x8xf32>
    %129 = vector.shape_cast %128 : vector<8x1x8xf32> to vector<8x8xf32>
    %c0_90 = arith.constant 0 : index
    %c120 = arith.constant 120 : index
    %130 = vector.load %arg10[%c0_90, %c120] : memref<8x128xf32, #tpu.memory_space<vmem>>, vector<8x8xf32>
    tpu.vector_store %arg10[%c0_90, %c120], %129 {strides = array<i32>} : memref<8x128xf32, #tpu.memory_space<vmem>>, vector<8x8xf32>,
    %c0_91 = arith.constant 0 : index
    %c0_92 = arith.constant 0 : index
    %131 = vector.load %arg10[%c0_91, %c0_92] : memref<8x128xf32, #tpu.memory_space<vmem>>, vector<8x128xf32>
    %132 = vector.broadcast %29 : vector<1x128xf32> to vector<8x128xf32>
    %133 = arith.addf %131, %132 : vector<8x128xf32>
    %cst_93 = arith.constant 2.000000e+01 : f32
    %134 = vector.broadcast %cst_93 : f32 to vector<8x128xf32>
    %135 = arith.minimumf %133, %134 : vector<8x128xf32>
    %136 = math.exp %135 : vector<8x128xf32>
    %cst_94 = arith.constant 2.000000e+00 : f32
    %137 = vector.broadcast %cst_94 : f32 to vector<8x128xf32>
    %138 = arith.addf %136, %137 : vector<8x128xf32>
    %139 = arith.mulf %136, %138 : vector<8x128xf32>
    %cst_95 = arith.constant 2.000000e+00 : f32
    %140 = vector.broadcast %cst_95 : f32 to vector<8x128xf32>
    %141 = arith.addf %139, %140 : vector<8x128xf32>
    %142 = tpu.reciprocal %141 {approx = true} : vector<8x128xf32> -> vector<8x128xf32>
    %143 = arith.mulf %139, %142 : vector<8x128xf32>
    %144 = arith.mulf %133, %143 : vector<8x128xf32>
    %cst_96 = arith.constant 2.000000e+01 : f32
    %145 = vector.broadcast %cst_96 : f32 to vector<8x128xf32>
    %146 = arith.cmpf ogt, %133, %145 : vector<8x128xf32>
    %147 = arith.select %146, %133, %144 : vector<8x128xi1>, vector<8x128xf32>
    %c0_97 = arith.constant 0 : index
    %c0_98 = arith.constant 0 : index
    %148 = vector.load %arg6[%c0_97, %c0_98] : memref<128x16xf32, #tpu.memory_space<vmem>>, vector<128x16xf32>
    %cst_99 = arith.constant dense<0.000000e+00> : vector<8x16xf32>
    %149 = tpu.matmul %147, %148, %cst_99 {dimension_numbers = #tpu.dot_dimension_numbers<[1], [0], [0], [1], [0, 0, 1, 1], [], []>} : vector<8x128xf32>, vector<128x16xf32>, vector<8x16xf32> -> vector<8x16xf32>
    %150 = vector.broadcast %30 : vector<1x16xf32> to vector<8x16xf32>
    %151 = arith.addf %149, %150 : vector<8x16xf32>
    %c0_100 = arith.constant 0 : index
    %c0_101 = arith.constant 0 : index
    %152 = vector.load %arg8[%c0_100, %c0_101] : memref<8x16xf32, #tpu.memory_space<vmem>>, vector<8x16xf32>
    tpu.vector_store %arg8[%c0_100, %c0_101], %151 {strides = array<i32>} : memref<8x16xf32, #tpu.memory_space<vmem>>, vector<8x16xf32>,
    return
  }
  func.func @transform_0(%arg0: i32) -> (i32, i32, i32) {
    %c0_i32 = arith.constant 0 : i32
    %c0_i32_0 = arith.constant 0 : i32
    %c0_i32_1 = arith.constant 0 : i32
    return %arg0, %c0_i32, %c0_i32_0 : i32, i32, i32
  }
  func.func @transform_1(%arg0: i32) -> (i32, i32) {
    %c0_i32 = arith.constant 0 : i32
    %c0_i32_0 = arith.constant 0 : i32
    return %arg0, %c0_i32 : i32, i32
  }
  func.func @transform_2(%arg0: i32) -> (i32, i32, i32) {
    %c0_i32 = arith.constant 0 : i32
    %c0_i32_0 = arith.constant 0 : i32
    %c0_i32_1 = arith.constant 0 : i32
    %c0_i32_2 = arith.constant 0 : i32
    return %c0_i32, %c0_i32_0, %c0_i32_1 : i32, i32, i32
  }
  func.func @transform_3(%arg0: i32) -> (i32, i32, i32) {
    %c0_i32 = arith.constant 0 : i32
    %c0_i32_0 = arith.constant 0 : i32
    %c0_i32_1 = arith.constant 0 : i32
    %c0_i32_2 = arith.constant 0 : i32
    return %c0_i32, %c0_i32_0, %c0_i32_1 : i32, i32, i32
  }
  func.func @transform_4(%arg0: i32) -> (i32, i32) {
    %c0_i32 = arith.constant 0 : i32
    %c0_i32_0 = arith.constant 0 : i32
    %c0_i32_1 = arith.constant 0 : i32
    return %c0_i32, %c0_i32_0 : i32, i32
  }
  func.func @transform_5(%arg0: i32) -> (i32, i32) {
    %c0_i32 = arith.constant 0 : i32
    %c0_i32_0 = arith.constant 0 : i32
    %c0_i32_1 = arith.constant 0 : i32
    return %c0_i32, %c0_i32_0 : i32, i32
  }
  func.func @transform_6(%arg0: i32) -> (i32, i32) {
    %c0_i32 = arith.constant 0 : i32
    %c0_i32_0 = arith.constant 0 : i32
    %c0_i32_1 = arith.constant 0 : i32
    return %c0_i32, %c0_i32_0 : i32, i32
  }
  func.func @transform_7(%arg0: i32) -> (i32, i32) {
    %c0_i32 = arith.constant 0 : i32
    %c0_i32_0 = arith.constant 0 : i32
    return %arg0, %c0_i32 : i32, i32
  }
}

</mosaic_0001>

<llo_original>
// kernel: tpu_custom_call.1
$region0: #{tpu_custom_call.1}
  #allocation0 [shape = 'u32[]', space=smem, size = 0x4, offset = 0x4, fixed_abs, tag = 'smem constant byte address 0x4 - core index']
  #allocation1 [shape = 'u32[144,128]{1,0:T(1,128)}', space=vmem, size = 0x12000, scoped, tag = 'internal scratch']
  #allocation2 [shape = 'f32[128,128]{1,0:T(8,128)}', space=vmem, size = 0x10000, scoped, tag = 'scratch operand']
  #allocation3 [shape = 'f32[8,128]{1,0:T(8,128)}', space=vmem, size = 0x1000, scoped, tag = 'scratch operand']
  %s0 = inlined_call_operand.vmem [shape: f32[8,16,16], index: 0, kind: input, shape index: {}]
  %s1 = inlined_call_operand.vmem [shape: f32[128,16], index: 1, kind: input, shape index: {}]
  %s2 = inlined_call_operand.vmem [shape: f32[2,16,32], index: 2, kind: input, shape index: {}]
  %s3 = inlined_call_operand.vmem [shape: f32[2,32,32], index: 3, kind: input, shape index: {}]
  %s4 = inlined_call_operand.vmem [shape: f32[32,8], index: 4, kind: input, shape index: {}]
  %s5 = inlined_call_operand.vmem [shape: f32[128,16], index: 5, kind: input, shape index: {}]
  %s6 = inlined_call_operand.vmem [shape: f32[1,208], index: 6, kind: input, shape index: {}]
  %s7 = inlined_call_operand.hbm [shape: f32[8,16], index: 7, kind: output, shape index: {}]
  %s8 = sld [smem:[#allocation0]]
  $region38: #{tpu_custom_call.1} parent=0
    _
  %s10 = ssub.s32 1, %s8
  %s11 = scalar_select 0, %s10, %s8
  $region1: #{tpu_custom_call.1} parent=0
    #allocation4 [shape = 'u8[4096]{0}', space=vmem, size = 0x1000, scoped, tag = 'output window, operand 0, single buffered']
    #allocation5 [shape = 's32[1]{0}', space=sflag, size = 0x4, scoped, tag = 'scoped memory for tpu_custom_call.1']
    %12 = vsyncpa [#allocation5], 0
    // Predicated region
    $region2: #{tpu_custom_call.1} parent=1 // pred_check
      _
    $region3: #{tpu_custom_call.1} parent=1 // pred_check_branch
      %14 = sbr.rel (0) target = $region5
    $region4: #{tpu_custom_call.1} parent=1 // pred_region
      _
    $region5: #{tpu_custom_call.1} parent=1 // pred_fallthru
      _
    // Predicated region
    $region6: #{tpu_custom_call.1} parent=1 // pred_check
      _
    $region7: #{tpu_custom_call.1} parent=1 // pred_check_branch
      %16 = sbr.rel (0) target = $region9
    $region8: #{tpu_custom_call.1} parent=1 // pred_region
      _
    $region9: #{tpu_custom_call.1} parent=1 // pred_fallthru
      _
    // Predicated region
    $region10: #{tpu_custom_call.1} parent=1 // pred_check
      _
    $region11: #{tpu_custom_call.1} parent=1 // pred_check_branch
      %18 = sbr.rel (0) target = $region13
    $region12: #{tpu_custom_call.1} parent=1 // pred_region
      _
    $region13: #{tpu_custom_call.1} parent=1 // pred_fallthru
      _
    // Predicated region
    $region14: #{tpu_custom_call.1} parent=1 // pred_check
      _
    $region15: #{tpu_custom_call.1} parent=1 // pred_check_branch
      %20 = sbr.rel (0) target = $region17
    $region16: #{tpu_custom_call.1} parent=1 // pred_region
      _
    $region17: #{tpu_custom_call.1} parent=1 // pred_fallthru
      _
    // Predicated region
    $region18: #{tpu_custom_call.1} parent=1 // pred_check
      _
    $region19: #{tpu_custom_call.1} parent=1 // pred_check_branch
      %22 = sbr.rel (0) target = $region21
    $region20: #{tpu_custom_call.1} parent=1 // pred_region
      _
    $region21: #{tpu_custom_call.1} parent=1 // pred_fallthru
      _
    // Predicated region
    $region22: #{tpu_custom_call.1} parent=1 // pred_check
      _
    $region23: #{tpu_custom_call.1} parent=1 // pred_check_branch
      %24 = sbr.rel (0) target = $region25
    $region24: #{tpu_custom_call.1} parent=1 // pred_region
      _
    $region25: #{tpu_custom_call.1} parent=1 // pred_fallthru
      _
    // Predicated region
    $region26: #{tpu_custom_call.1} parent=1 // pred_check
      _
    $region27: #{tpu_custom_call.1} parent=1 // pred_check_branch
      %26 = sbr.rel (0) target = $region29
    $region28: #{tpu_custom_call.1} parent=1 // pred_region
      _
    $region29: #{tpu_custom_call.1} parent=1 // pred_fallthru
      _
    %27 = vst [vmem:[#allocation2] sm:$0xff] 0.0
    %28 = vst [vmem:[#allocation2 + $0x8] sm:$0xff] 0.0
    %29 = vst [vmem:[#allocation2 + $0x10] sm:$0xff] 0.0
    %30 = vst [vmem:[#allocation2 + $0x18] sm:$0xff] 0.0
    %31 = vst [vmem:[#allocation2 + $0x20] sm:$0xff] 0.0
    %32 = vst [vmem:[#allocation2 + $0x28] sm:$0xff] 0.0
    %33 = vst [vmem:[#allocation2 + $0x30] sm:$0xff] 0.0
    %34 = vst [vmem:[#allocation2 + $0x38] sm:$0xff] 0.0
    %35 = vst [vmem:[#allocation2 + $0x40] sm:$0xff] 0.0
    %36 = vst [vmem:[#allocation2 + $0x48] sm:$0xff] 0.0
    %37 = vst [vmem:[#allocation2 + $0x50] sm:$0xff] 0.0
    %38 = vst [vmem:[#allocation2 + $0x58] sm:$0xff] 0.0
    %39 = vst [vmem:[#allocation2 + $0x60] sm:$0xff] 0.0
    %40 = vst [vmem:[#allocation2 + $0x68] sm:$0xff] 0.0
    %41 = vst [vmem:[#allocation2 + $0x70] sm:$0xff] 0.0
    %42 = vst [vmem:[#allocation2 + $0x78] sm:$0xff] 0.0
    %v43 = vld [vmem:[%s0] sm:$0xff]
    %v44 = vld [vmem:[%s0 + $0x8] sm:$0xff]
    %vm45 = vcmask 130048
    %46 = vst.msk [vmem:[#allocation2] sm:$0xff] %vm45, %v43
    %47 = vst.msk [vmem:[#allocation2 + $0x8] sm:$0xff] %vm45, %v44
    %s48 = scalar_lea.vmem %s0, 16
    %v49 = vld [vmem:[%s48] sm:$0xff]
    %v50 = vld [vmem:[%s48 + $0x8] sm:$0xff]
    %53 = vrot.lane.b32.xlu0 %v49, 16
    %v54 = vpop.permute.xlu0 %53
    %55 = vrot.lane.b32.xlu0 %v50, 16
    %v56 = vpop.permute.xlu0 %55
    %vm59 = vcmask 261248
    %60 = vst.msk [vmem:[#allocation2 + $0x10] sm:$0xff] %vm59, %v54
    %61 = vst.msk [vmem:[#allocation2 + $0x18] sm:$0xff] %vm59, %v56
    %s62 = scalar_lea.vmem %s0, 32
    %v63 = vld [vmem:[%s62] sm:$0xff]
    %v64 = vld [vmem:[%s62 + $0x8] sm:$0xff]
    %67 = vrot.lane.b32.xlu0 %v63, 32
    %v68 = vpop.permute.xlu0 %67
    %69 = vrot.lane.b32.xlu0 %v64, 32
    %v70 = vpop.permute.xlu0 %69
    %vm73 = vcmask 392448
    %74 = vst.msk [vmem:[#allocation2 + $0x20] sm:$0xff] %vm73, %v68
    %75 = vst.msk [vmem:[#allocation2 + $0x28] sm:$0xff] %vm73, %v70
    %s76 = scalar_lea.vmem %s0, 48
    %v77 = vld [vmem:[%s76] sm:$0xff]
    %v78 = vld [vmem:[%s76 + $0x8] sm:$0xff]
    %81 = vrot.lane.b32.xlu0 %v77, 48
    %v82 = vpop.permute.xlu0 %81
    %83 = vrot.lane.b32.xlu0 %v78, 48
    %v84 = vpop.permute.xlu0 %83
    %vm87 = vcmask 523648
    %88 = vst.msk [vmem:[#allocation2 + $0x30] sm:$0xff] %vm87, %v82
    %89 = vst.msk [vmem:[#allocation2 + $0x38] sm:$0xff] %vm87, %v84
    %s90 = scalar_lea.vmem %s0, 64
    %v91 = vld [vmem:[%s90] sm:$0xff]
    %v92 = vld [vmem:[%s90 + $0x8] sm:$0xff]
    %95 = vrot.lane.b32.xlu0 %v91, 64
    %v96 = vpop.permute.xlu0 %95
    %97 = vrot.lane.b32.xlu0 %v92, 64
    %v98 = vpop.permute.xlu0 %97
    %vm101 = vcmask 654848
    %102 = vst.msk [vmem:[#allocation2 + $0x40] sm:$0xff] %vm101, %v96
    %103 = vst.msk [vmem:[#allocation2 + $0x48] sm:$0xff] %vm101, %v98
    %s104 = scalar_lea.vmem %s0, 80
    %v105 = vld [vmem:[%s104] sm:$0xff]
    %v106 = vld [vmem:[%s104 + $0x8] sm:$0xff]
    %109 = vrot.lane.b32.xlu0 %v105, 80
    %v110 = vpop.permute.xlu0 %109
    %111 = vrot.lane.b32.xlu0 %v106, 80
    %v112 = vpop.permute.xlu0 %111
    %vm115 = vcmask 786048
    %116 = vst.msk [vmem:[#allocation2 + $0x50] sm:$0xff] %vm115, %v110
    %117 = vst.msk [vmem:[#allocation2 + $0x58] sm:$0xff] %vm115, %v112
    %s118 = scalar_lea.vmem %s0, 96
    %v119 = vld [vmem:[%s118] sm:$0xff]
    %v120 = vld [vmem:[%s118 + $0x8] sm:$0xff]
    %123 = vrot.lane.b32.xlu0 %v119, 96
    %v124 = vpop.permute.xlu0 %123
    %125 = vrot.lane.b32.xlu0 %v120, 96
    %v126 = vpop.permute.xlu0 %125
    %vm129 = vcmask 917248
    %130 = vst.msk [vmem:[#allocation2 + $0x60] sm:$0xff] %vm129, %v124
    %131 = vst.msk [vmem:[#allocation2 + $0x68] sm:$0xff] %vm129, %v126
    %s132 = scalar_lea.vmem %s0, 112
    %v133 = vld [vmem:[%s132] sm:$0xff]
    %v134 = vld [vmem:[%s132 + $0x8] sm:$0xff]
    %137 = vrot.lane.b32.xlu0 %v133, 112
    %v138 = vpop.permute.xlu0 %137
    %139 = vrot.lane.b32.xlu0 %v134, 112
    %v140 = vpop.permute.xlu0 %139
    %vm143 = vcmask 1048448
    %144 = vst.msk [vmem:[#allocation2 + $0x70] sm:$0xff] %vm143, %v138
    %145 = vst.msk [vmem:[#allocation2 + $0x78] sm:$0xff] %vm143, %v140
    %v146 = vld [vmem:[#allocation2] sm:$0xff]
    %v147 = vld [vmem:[#allocation2 + $0x8] sm:$0xff]
    %v148 = vld [vmem:[#allocation2 + $0x10] sm:$0xff]
    %v149 = vld [vmem:[#allocation2 + $0x18] sm:$0xff]
    %v150 = vld [vmem:[#allocation2 + $0x20] sm:$0xff]
    %v151 = vld [vmem:[#allocation2 + $0x28] sm:$0xff]
    %v152 = vld [vmem:[#allocation2 + $0x30] sm:$0xff]
    %v153 = vld [vmem:[#allocation2 + $0x38] sm:$0xff]
    %v154 = vld [vmem:[#allocation2 + $0x40] sm:$0xff]
    %v155 = vld [vmem:[#allocation2 + $0x48] sm:$0xff]
    %v156 = vld [vmem:[#allocation2 + $0x50] sm:$0xff]
    %v157 = vld [vmem:[#allocation2 + $0x58] sm:$0xff]
    %v158 = vld [vmem:[#allocation2 + $0x60] sm:$0xff]
    %v159 = vld [vmem:[#allocation2 + $0x68] sm:$0xff]
    %v160 = vld [vmem:[#allocation2 + $0x70] sm:$0xff]
    %v161 = vld [vmem:[#allocation2 + $0x78] sm:$0xff]
    %v162 = vld [vmem:[%s6] sm:$0x1]
    %v163 = vld [vmem:[%s6] sm:$0x3]
    %v164 = vld [vmem:[%s6 + $0x1] sm:$0x1]
    %v165 = vld [vmem:[%s1] sm:$0xff]
    %v166 = vld [vmem:[%s1 + $0x8] sm:$0xff]
    %v167 = vld [vmem:[%s1 + $0x10] sm:$0xff]
    %v168 = vld [vmem:[%s1 + $0x18] sm:$0xff]
    %v169 = vld [vmem:[%s1 + $0x20] sm:$0xff]
    %v170 = vld [vmem:[%s1 + $0x28] sm:$0xff]
    %v171 = vld [vmem:[%s1 + $0x30] sm:$0xff]
    %v172 = vld [vmem:[%s1 + $0x38] sm:$0xff]
    %v173 = vld [vmem:[%s1 + $0x40] sm:$0xff]
    %v174 = vld [vmem:[%s1 + $0x48] sm:$0xff]
    %v175 = vld [vmem:[%s1 + $0x50] sm:$0xff]
    %v176 = vld [vmem:[%s1 + $0x58] sm:$0xff]
    %v177 = vld [vmem:[%s1 + $0x60] sm:$0xff]
    %v178 = vld [vmem:[%s1 + $0x68] sm:$0xff]
    %v179 = vld [vmem:[%s1 + $0x70] sm:$0xff]
    %v180 = vld [vmem:[%s1 + $0x78] sm:$0xff]
    %181 = vmatprep.subr.mxu0 0.0
    %182 = vmatpush1.msra.mxu0 %v180
    %183 = vmatprep.subr.mxu0 0.0
    %184 = vmatpush1.msra.mxu0 %v179
    %185 = vmatprep.subr.mxu0 0.0
    %186 = vmatpush1.msra.mxu0 %v178
    %187 = vmatprep.subr.mxu0 0.0
    %188 = vmatpush1.msra.mxu0 %v177
    %189 = vmatprep.subr.mxu0 0.0
    %190 = vmatpush1.msra.mxu0 %v176
    %191 = vmatprep.subr.mxu0 0.0
    %192 = vmatpush1.msra.mxu0 %v175
    %193 = vmatprep.subr.mxu0 0.0
    %194 = vmatpush1.msra.mxu0 %v174
    %195 = vmatprep.subr.mxu0 0.0
    %196 = vmatpush1.msra.mxu0 %v173
    %197 = vmatprep.subr.mxu0 0.0
    %198 = vmatpush1.msra.mxu0 %v172
    %199 = vmatprep.subr.mxu0 0.0
    %200 = vmatpush1.msra.mxu0 %v171
    %201 = vmatprep.subr.mxu0 0.0
    %202 = vmatpush1.msra.mxu0 %v170
    %203 = vmatprep.subr.mxu0 0.0
    %204 = vmatpush1.msra.mxu0 %v169
    %205 = vmatprep.subr.mxu0 0.0
    %206 = vmatpush1.msra.mxu0 %v168
    %207 = vmatprep.subr.mxu0 0.0
    %208 = vmatpush1.msra.mxu0 %v167
    %209 = vmatprep.subr.mxu0 0.0
    %210 = vmatpush1.msra.mxu0 %v166
    %211 = vmatprep.subr.mxu0 0.0
    %212 = vmatpush1.msra.mxu0 %v165
    %213 = vmatprep.subr.mxu0 0.0
    %214 = vmatpush2.msra.mxu0 0.0
    %215 = vmatprep.subr.mxu0 0.0
    %216 = vmatpush2.msra.mxu0 0.0
    %217 = vmatprep.subr.mxu0 0.0
    %218 = vmatpush2.msra.mxu0 0.0
    %219 = vmatprep.subr.mxu0 0.0
    %220 = vmatpush2.msra.mxu0 0.0
    %221 = vmatprep.subr.mxu0 0.0
    %222 = vmatpush2.msra.mxu0 0.0
    %223 = vmatprep.subr.mxu0 0.0
    %224 = vmatpush2.msra.mxu0 0.0
    %225 = vmatprep.subr.mxu0 0.0
    %226 = vmatpush2.msra.mxu0 0.0
    %227 = vmatprep.subr.mxu0 0.0
    %228 = vmatpush2.msra.mxu0 0.0
    %229 = vmatprep.subr.mxu0 0.0
    %230 = vmatpush2.msra.mxu0 0.0
    %231 = vmatprep.subr.mxu0 0.0
    %232 = vmatpush2.msra.mxu0 0.0
    %233 = vmatprep.subr.mxu0 0.0
    %234 = vmatpush2.msra.mxu0 0.0
    %235 = vmatprep.subr.mxu0 0.0
    %236 = vmatpush2.msra.mxu0 0.0
    %237 = vmatprep.subr.mxu0 0.0
    %238 = vmatpush2.msra.mxu0 0.0
    %239 = vmatprep.subr.mxu0 0.0
    %240 = vmatpush2.msra.mxu0 0.0
    %241 = vmatprep.subr.mxu0 0.0
    %242 = vmatpush2.msra.mxu0 0.0
    %243 = vmatprep.subr.mxu0 0.0
    %244 = vmatpush2.msra.mxu0 0.0
    %245 = vmatprep.mubr.f32.mxu0 0.0
    %246 = vmatmul.mubr.f32.gmra.mxu0 %v146
    %v247 = vpop.f32.mrf.mxu0
    %v248 = vadd.f32 0.0, %v247
    %v249 = vpop.f32.mrf.mxu0
    %250 = vmatprep.mubr.f32.mxu0 0.0
    %251 = vmatmul.mubr.f32.gmra.mxu0 %v147
    %v252 = vpop.f32.mrf.mxu0
    %v253 = vadd.f32 0.0, %v252
    %v254 = vpop.f32.mrf.mxu0
    %255 = vmatprep.mubr.f32.mxu0 0.0
    %256 = vmatmul.mubr.f32.gmra.mxu0 %v148
    %v257 = vpop.f32.mrf.mxu0
    %v258 = vadd.f32 0.0, %v257
    %v259 = vpop.f32.mrf.mxu0
    %260 = vmatprep.mubr.f32.mxu0 0.0
    %261 = vmatmul.mubr.f32.gmra.mxu0 %v149
    %v262 = vpop.f32.mrf.mxu0
    %v263 = vadd.f32 0.0, %v262
    %v264 = vpop.f32.mrf.mxu0
    %265 = vmatprep.mubr.f32.mxu0 0.0
    %266 = vmatmul.mubr.f32.gmra.mxu0 %v150
    %v267 = vpop.f32.mrf.mxu0
    %v268 = vadd.f32 0.0, %v267
    %v269 = vpop.f32.mrf.mxu0
    %270 = vmatprep.mubr.f32.mxu0 0.0
    %271 = vmatmul.mubr.f32.gmra.mxu0 %v151
    %v272 = vpop.f32.mrf.mxu0
    %v273 = vadd.f32 0.0, %v272
    %v274 = vpop.f32.mrf.mxu0
    %275 = vmatprep.mubr.f32.mxu0 0.0
    %276 = vmatmul.mubr.f32.gmra.mxu0 %v152
    %v277 = vpop.f32.mrf.mxu0
    %v278 = vadd.f32 0.0, %v277
    %v279 = vpop.f32.mrf.mxu0
    %280 = vmatprep.mubr.f32.mxu0 0.0
    %281 = vmatmul.mubr.f32.gmra.mxu0 %v153
    %v282 = vpop.f32.mrf.mxu0
    %v283 = vadd.f32 0.0, %v282
    %v284 = vpop.f32.mrf.mxu0
    %285 = vmatprep.mubr.f32.mxu0 0.0
    %286 = vmatmul.mubr.f32.gmra.mxu0 %v154
    %v287 = vpop.f32.mrf.mxu0
    %v288 = vadd.f32 0.0, %v287
    %v289 = vpop.f32.mrf.mxu0
    %290 = vmatprep.mubr.f32.mxu0 0.0
    %291 = vmatmul.mubr.f32.gmra.mxu0 %v155
    %v292 = vpop.f32.mrf.mxu0
    %v293 = vadd.f32 0.0, %v292
    %v294 = vpop.f32.mrf.mxu0
    %295 = vmatprep.mubr.f32.mxu0 0.0
    %296 = vmatmul.mubr.f32.gmra.mxu0 %v156
    %v297 = vpop.f32.mrf.mxu0
    %v298 = vadd.f32 0.0, %v297
    %v299 = vpop.f32.mrf.mxu0
    %300 = vmatprep.mubr.f32.mxu0 0.0
    %301 = vmatmul.mubr.f32.gmra.mxu0 %v157
    %v302 = vpop.f32.mrf.mxu0
    %v303 = vadd.f32 0.0, %v302
    %v304 = vpop.f32.mrf.mxu0
    %305 = vmatprep.mubr.f32.mxu0 0.0
    %306 = vmatmul.mubr.f32.gmra.mxu0 %v158
    %v307 = vpop.f32.mrf.mxu0
    %v308 = vadd.f32 0.0, %v307
    %v309 = vpop.f32.mrf.mxu0
    %310 = vmatprep.mubr.f32.mxu0 0.0
    %311 = vmatmul.mubr.f32.gmra.mxu0 %v159
    %v312 = vpop.f32.mrf.mxu0
    %v313 = vadd.f32 0.0, %v312
    %v314 = vpop.f32.mrf.mxu0
    %315 = vmatprep.mubr.f32.mxu0 0.0
    %316 = vmatmul.mubr.f32.gmra.mxu0 %v160
    %v317 = vpop.f32.mrf.mxu0
    %v318 = vadd.f32 0.0, %v317
    %v319 = vpop.f32.mrf.mxu0
    %320 = vmatprep.mubr.f32.mxu0 0.0
    %321 = vmatmul.mubr.f32.gmra.mxu0 %v161
    %v322 = vpop.f32.mrf.mxu0
    %v323 = vadd.f32 0.0, %v322
    %v324 = vpop.f32.mrf.mxu0
    %325 = vdwg.mxu0
    %v326 = vld [vmem:[%s2] sm:$0xff]
    %v327 = vld [vmem:[%s2 + $0x8] sm:$0xff]
    %s328 = scalar_lea.vmem %s2, 16
    %v329 = vld [vmem:[%s328] sm:$0xff]
    %v330 = vld [vmem:[%s328 + $0x8] sm:$0xff]
    %v332 = vsel %vm45, %v248, 0
    %v335 = vsel %vm45, %v253, 0
    %v338 = vsel %vm45, %v258, 0
    %v341 = vsel %vm45, %v263, 0
    %v344 = vsel %vm45, %v268, 0
    %v347 = vsel %vm45, %v273, 0
    %v350 = vsel %vm45, %v278, 0
    %v353 = vsel %vm45, %v283, 0
    %v356 = vsel %vm45, %v288, 0
    %v359 = vsel %vm45, %v293, 0
    %v362 = vsel %vm45, %v298, 0
    %v365 = vsel %vm45, %v303, 0
    %v368 = vsel %vm45, %v308, 0
    %v371 = vsel %vm45, %v313, 0
    %v374 = vsel %vm45, %v318, 0
    %v377 = vsel %vm45, %v323, 0
    %379 = vmatprep.subr.mxu0 0.0
    %380 = vmatpush1.msra.mxu0 0.0
    %381 = vmatprep.subr.mxu0 0.0
    %382 = vmatpush1.msra.mxu0 0.0
    %383 = vmatprep.subr.mxu0 0.0
    %384 = vmatpush1.msra.mxu0 0.0
    %385 = vmatprep.subr.mxu0 0.0
    %386 = vmatpush1.msra.mxu0 0.0
    %387 = vmatprep.subr.mxu0 0.0
    %388 = vmatpush1.msra.mxu0 0.0
    %389 = vmatprep.subr.mxu0 0.0
    %390 = vmatpush1.msra.mxu0 0.0
    %391 = vmatprep.subr.mxu0 0.0
    %392 = vmatpush1.msra.mxu0 0.0
    %393 = vmatprep.subr.mxu0 0.0
    %394 = vmatpush1.msra.mxu0 0.0
    %395 = vmatprep.subr.mxu0 0.0
    %396 = vmatpush1.msra.mxu0 0.0
    %397 = vmatprep.subr.mxu0 0.0
    %398 = vmatpush1.msra.mxu0 0.0
    %399 = vmatprep.subr.mxu0 0.0
    %400 = vmatpush1.msra.mxu0 0.0
    %401 = vmatprep.subr.mxu0 0.0
    %402 = vmatpush1.msra.mxu0 0.0
    %403 = vmatprep.subr.mxu0 0.0
    %404 = vmatpush1.msra.mxu0 0.0
    %405 = vmatprep.subr.mxu0 0.0
    %406 = vmatpush1.msra.mxu0 0.0
    %407 = vmatprep.subr.mxu0 0.0
    %408 = vmatpush1.msra.mxu0 %v330
    %409 = vmatprep.subr.mxu0 0.0
    %410 = vmatpush1.msra.mxu0 %v329
    %411 = vmatprep.subr.mxu0 0.0
    %412 = vmatpush2.msra.mxu0 0.0
    %413 = vmatprep.subr.mxu0 0.0
    %414 = vmatpush2.msra.mxu0 0.0
    %415 = vmatprep.subr.mxu0 0.0
    %416 = vmatpush2.msra.mxu0 0.0
    %417 = vmatprep.subr.mxu0 0.0
    %418 = vmatpush2.msra.mxu0 0.0
    %419 = vmatprep.subr.mxu0 0.0
    %420 = vmatpush2.msra.mxu0 0.0
    %421 = vmatprep.subr.mxu0 0.0
    %422 = vmatpush2.msra.mxu0 0.0
    %423 = vmatprep.subr.mxu0 0.0
    %424 = vmatpush2.msra.mxu0 0.0
    %425 = vmatprep.subr.mxu0 0.0
    %426 = vmatpush2.msra.mxu0 0.0
    %427 = vmatprep.subr.mxu0 0.0
    %428 = vmatpush2.msra.mxu0 0.0
    %429 = vmatprep.subr.mxu0 0.0
    %430 = vmatpush2.msra.mxu0 0.0
    %431 = vmatprep.subr.mxu0 0.0
    %432 = vmatpush2.msra.mxu0 0.0
    %433 = vmatprep.subr.mxu0 0.0
    %434 = vmatpush2.msra.mxu0 0.0
    %435 = vmatprep.subr.mxu0 0.0
    %436 = vmatpush2.msra.mxu0 0.0
    %437 = vmatprep.subr.mxu0 0.0
    %438 = vmatpush2.msra.mxu0 0.0
    %439 = vmatprep.subr.mxu0 0.0
    %440 = vmatpush2.msra.mxu0 0.0
    %441 = vmatprep.subr.mxu0 0.0
    %442 = vmatpush2.msra.mxu0 0.0
    %443 = vmatprep.mubr.f32.mxu0 0.0
    %444 = vmatmul.mubr.f32.gmra.mxu0 %v332
    %v445 = vpop.f32.mrf.mxu0
    %v446 = vadd.f32 0.0, %v445
    %v447 = vpop.f32.mrf.mxu0
    %448 = vmatprep.mubr.f32.mxu0 0.0
    %449 = vmatmul.mubr.f32.gmra.mxu0 %v335
    %v450 = vpop.f32.mrf.mxu0
    %v451 = vadd.f32 0.0, %v450
    %v452 = vpop.f32.mrf.mxu0
    %453 = vmatprep.mubr.f32.mxu0 0.0
    %454 = vmatmul.mubr.f32.gmra.mxu0 %v338
    %v455 = vpop.f32.mrf.mxu0
    %v456 = vadd.f32 0.0, %v455
    %v457 = vpop.f32.mrf.mxu0
    %458 = vmatprep.mubr.f32.mxu0 0.0
    %459 = vmatmul.mubr.f32.gmra.mxu0 %v341
    %v460 = vpop.f32.mrf.mxu0
    %v461 = vadd.f32 0.0, %v460
    %v462 = vpop.f32.mrf.mxu0
    %463 = vmatprep.mubr.f32.mxu0 0.0
    %464 = vmatmul.mubr.f32.gmra.mxu0 %v344
    %v465 = vpop.f32.mrf.mxu0
    %v466 = vadd.f32 0.0, %v465
    %v467 = vpop.f32.mrf.mxu0
    %468 = vmatprep.mubr.f32.mxu0 0.0
    %469 = vmatmul.mubr.f32.gmra.mxu0 %v347
    %v470 = vpop.f32.mrf.mxu0
    %v471 = vadd.f32 0.0, %v470
    %v472 = vpop.f32.mrf.mxu0
    %473 = vmatprep.mubr.f32.mxu0 0.0
    %474 = vmatmul.mubr.f32.gmra.mxu0 %v350
    %v475 = vpop.f32.mrf.mxu0
    %v476 = vadd.f32 0.0, %v475
    %v477 = vpop.f32.mrf.mxu0
    %478 = vmatprep.mubr.f32.mxu0 0.0
    %479 = vmatmul.mubr.f32.gmra.mxu0 %v353
    %v480 = vpop.f32.mrf.mxu0
    %v481 = vadd.f32 0.0, %v480
    %v482 = vpop.f32.mrf.mxu0
    %483 = vmatprep.mubr.f32.mxu0 0.0
    %484 = vmatmul.mubr.f32.gmra.mxu0 %v356
    %v485 = vpop.f32.mrf.mxu0
    %v486 = vadd.f32 0.0, %v485
    %v487 = vpop.f32.mrf.mxu0
    %488 = vmatprep.mubr.f32.mxu0 0.0
    %489 = vmatmul.mubr.f32.gmra.mxu0 %v359
    %v490 = vpop.f32.mrf.mxu0
    %v491 = vadd.f32 0.0, %v490
    %v492 = vpop.f32.mrf.mxu0
    %493 = vmatprep.mubr.f32.mxu0 0.0
    %494 = vmatmul.mubr.f32.gmra.mxu0 %v362
    %v495 = vpop.f32.mrf.mxu0
    %v496 = vadd.f32 0.0, %v495
    %v497 = vpop.f32.mrf.mxu0
    %498 = vmatprep.mubr.f32.mxu0 0.0
    %499 = vmatmul.mubr.f32.gmra.mxu0 %v365
    %v500 = vpop.f32.mrf.mxu0
    %v501 = vadd.f32 0.0, %v500
    %v502 = vpop.f32.mrf.mxu0
    %503 = vmatprep.mubr.f32.mxu0 0.0
    %504 = vmatmul.mubr.f32.gmra.mxu0 %v368
    %v505 = vpop.f32.mrf.mxu0
    %v506 = vadd.f32 0.0, %v505
    %v507 = vpop.f32.mrf.mxu0
    %508 = vmatprep.mubr.f32.mxu0 0.0
    %509 = vmatmul.mubr.f32.gmra.mxu0 %v371
    %v510 = vpop.f32.mrf.mxu0
    %v511 = vadd.f32 0.0, %v510
    %v512 = vpop.f32.mrf.mxu0
    %513 = vmatprep.mubr.f32.mxu0 0.0
    %514 = vmatmul.mubr.f32.gmra.mxu0 %v374
    %v515 = vpop.f32.mrf.mxu0
    %v516 = vadd.f32 0.0, %v515
    %v517 = vpop.f32.mrf.mxu0
    %518 = vmatprep.mubr.f32.mxu0 0.0
    %519 = vmatmul.mubr.f32.gmra.mxu0 %v377
    %v520 = vpop.f32.mrf.mxu0
    %v521 = vadd.f32 0.0, %v520
    %v522 = vpop.f32.mrf.mxu0
    %523 = vdwg.mxu0
    %v525 = vsel %vm45, %v165, 0
    %v528 = vsel %vm45, %v166, 0
    %v531 = vsel %vm45, %v167, 0
    %v534 = vsel %vm45, %v168, 0
    %v537 = vsel %vm45, %v169, 0
    %v540 = vsel %vm45, %v170, 0
    %v543 = vsel %vm45, %v171, 0
    %v546 = vsel %vm45, %v172, 0
    %v549 = vsel %vm45, %v173, 0
    %v552 = vsel %vm45, %v174, 0
    %v555 = vsel %vm45, %v175, 0
    %v558 = vsel %vm45, %v176, 0
    %v561 = vsel %vm45, %v177, 0
    %v564 = vsel %vm45, %v178, 0
    %v567 = vsel %vm45, %v179, 0
    %v570 = vsel %vm45, %v180, 0
    %572 = vmatprep.subr.mxu0 0.0
    %573 = vmatpush1.msra.mxu0 0.0
    %574 = vmatprep.subr.mxu0 0.0
    %575 = vmatpush1.msra.mxu0 0.0
    %576 = vmatprep.subr.mxu0 0.0
    %577 = vmatpush1.msra.mxu0 0.0
    %578 = vmatprep.subr.mxu0 0.0
    %579 = vmatpush1.msra.mxu0 0.0
    %580 = vmatprep.subr.mxu0 0.0
    %581 = vmatpush1.msra.mxu0 0.0
    %582 = vmatprep.subr.mxu0 0.0
    %583 = vmatpush1.msra.mxu0 0.0
    %584 = vmatprep.subr.mxu0 0.0
    %585 = vmatpush1.msra.mxu0 0.0
    %586 = vmatprep.subr.mxu0 0.0
    %587 = vmatpush1.msra.mxu0 0.0
    %588 = vmatprep.subr.mxu0 0.0
    %589 = vmatpush1.msra.mxu0 0.0
    %590 = vmatprep.subr.mxu0 0.0
    %591 = vmatpush1.msra.mxu0 0.0
    %592 = vmatprep.subr.mxu0 0.0
    %593 = vmatpush1.msra.mxu0 0.0
    %594 = vmatprep.subr.mxu0 0.0
    %595 = vmatpush1.msra.mxu0 0.0
    %596 = vmatprep.subr.mxu0 0.0
    %597 = vmatpush1.msra.mxu0 0.0
    %598 = vmatprep.subr.mxu0 0.0
    %599 = vmatpush1.msra.mxu0 0.0
    %600 = vmatprep.subr.mxu0 0.0
    %601 = vmatpush1.msra.mxu0 %v327
    %602 = vmatprep.subr.mxu0 0.0
    %603 = vmatpush1.msra.mxu0 %v326
    %604 = vmatprep.subr.mxu0 0.0
    %605 = vmatpush2.msra.mxu0 0.0
    %606 = vmatprep.subr.mxu0 0.0
    %607 = vmatpush2.msra.mxu0 0.0
    %608 = vmatprep.subr.mxu0 0.0
    %609 = vmatpush2.msra.mxu0 0.0
    %610 = vmatprep.subr.mxu0 0.0
    %611 = vmatpush2.msra.mxu0 0.0
    %612 = vmatprep.subr.mxu0 0.0
    %613 = vmatpush2.msra.mxu0 0.0
    %614 = vmatprep.subr.mxu0 0.0
    %615 = vmatpush2.msra.mxu0 0.0
    %616 = vmatprep.subr.mxu0 0.0
    %617 = vmatpush2.msra.mxu0 0.0
    %618 = vmatprep.subr.mxu0 0.0
    %619 = vmatpush2.msra.mxu0 0.0
    %620 = vmatprep.subr.mxu0 0.0
    %621 = vmatpush2.msra.mxu0 0.0
    %622 = vmatprep.subr.mxu0 0.0
    %623 = vmatpush2.msra.mxu0 0.0
    %624 = vmatprep.subr.mxu0 0.0
    %625 = vmatpush2.msra.mxu0 0.0
    %626 = vmatprep.subr.mxu0 0.0
    %627 = vmatpush2.msra.mxu0 0.0
    %628 = vmatprep.subr.mxu0 0.0
    %629 = vmatpush2.msra.mxu0 0.0
    %630 = vmatprep.subr.mxu0 0.0
    %631 = vmatpush2.msra.mxu0 0.0
    %632 = vmatprep.subr.mxu0 0.0
    %633 = vmatpush2.msra.mxu0 0.0
    %634 = vmatprep.subr.mxu0 0.0
    %635 = vmatpush2.msra.mxu0 0.0
    %636 = vmatprep.mubr.f32.mxu0 0.0
    %637 = vmatmul.mubr.f32.gmra.mxu0 %v525
    %v638 = vpop.f32.mrf.mxu0
    %v639 = vadd.f32 %v446, %v638
    %v640 = vpop.f32.mrf.mxu0
    %641 = vmatprep.mubr.f32.mxu0 0.0
    %642 = vmatmul.mubr.f32.gmra.mxu0 %v528
    %v643 = vpop.f32.mrf.mxu0
    %v644 = vadd.f32 %v451, %v643
    %v645 = vpop.f32.mrf.mxu0
    %646 = vmatprep.mubr.f32.mxu0 0.0
    %647 = vmatmul.mubr.f32.gmra.mxu0 %v531
    %v648 = vpop.f32.mrf.mxu0
    %v649 = vadd.f32 %v456, %v648
    %v650 = vpop.f32.mrf.mxu0
    %651 = vmatprep.mubr.f32.mxu0 0.0
    %652 = vmatmul.mubr.f32.gmra.mxu0 %v534
    %v653 = vpop.f32.mrf.mxu0
    %v654 = vadd.f32 %v461, %v653
    %v655 = vpop.f32.mrf.mxu0
    %656 = vmatprep.mubr.f32.mxu0 0.0
    %657 = vmatmul.mubr.f32.gmra.mxu0 %v537
    %v658 = vpop.f32.mrf.mxu0
    %v659 = vadd.f32 %v466, %v658
    %v660 = vpop.f32.mrf.mxu0
    %661 = vmatprep.mubr.f32.mxu0 0.0
    %662 = vmatmul.mubr.f32.gmra.mxu0 %v540
    %v663 = vpop.f32.mrf.mxu0
    %v664 = vadd.f32 %v471, %v663
    %v665 = vpop.f32.mrf.mxu0
    %666 = vmatprep.mubr.f32.mxu0 0.0
    %667 = vmatmul.mubr.f32.gmra.mxu0 %v543
    %v668 = vpop.f32.mrf.mxu0
    %v669 = vadd.f32 %v476, %v668
    %v670 = vpop.f32.mrf.mxu0
    %671 = vmatprep.mubr.f32.mxu0 0.0
    %672 = vmatmul.mubr.f32.gmra.mxu0 %v546
    %v673 = vpop.f32.mrf.mxu0
    %v674 = vadd.f32 %v481, %v673
    %v675 = vpop.f32.mrf.mxu0
    %676 = vmatprep.mubr.f32.mxu0 0.0
    %677 = vmatmul.mubr.f32.gmra.mxu0 %v549
    %v678 = vpop.f32.mrf.mxu0
    %v679 = vadd.f32 %v486, %v678
    %v680 = vpop.f32.mrf.mxu0
    %681 = vmatprep.mubr.f32.mxu0 0.0
    %682 = vmatmul.mubr.f32.gmra.mxu0 %v552
    %v683 = vpop.f32.mrf.mxu0
    %v684 = vadd.f32 %v491, %v683
    %v685 = vpop.f32.mrf.mxu0
    %686 = vmatprep.mubr.f32.mxu0 0.0
    %687 = vmatmul.mubr.f32.gmra.mxu0 %v555
    %v688 = vpop.f32.mrf.mxu0
    %v689 = vadd.f32 %v496, %v688
    %v690 = vpop.f32.mrf.mxu0
    %691 = vmatprep.mubr.f32.mxu0 0.0
    %692 = vmatmul.mubr.f32.gmra.mxu0 %v558
    %v693 = vpop.f32.mrf.mxu0
    %v694 = vadd.f32 %v501, %v693
    %v695 = vpop.f32.mrf.mxu0
    %696 = vmatprep.mubr.f32.mxu0 0.0
    %697 = vmatmul.mubr.f32.gmra.mxu0 %v561
    %v698 = vpop.f32.mrf.mxu0
    %v699 = vadd.f32 %v506, %v698
    %v700 = vpop.f32.mrf.mxu0
    %701 = vmatprep.mubr.f32.mxu0 0.0
    %702 = vmatmul.mubr.f32.gmra.mxu0 %v564
    %v703 = vpop.f32.mrf.mxu0
    %v704 = vadd.f32 %v511, %v703
    %v705 = vpop.f32.mrf.mxu0
    %706 = vmatprep.mubr.f32.mxu0 0.0
    %707 = vmatmul.mubr.f32.gmra.mxu0 %v567
    %v708 = vpop.f32.mrf.mxu0
    %v709 = vadd.f32 %v516, %v708
    %v710 = vpop.f32.mrf.mxu0
    %711 = vmatprep.mubr.f32.mxu0 0.0
    %712 = vmatmul.mubr.f32.gmra.mxu0 %v570
    %v713 = vpop.f32.mrf.mxu0
    %v714 = vadd.f32 %v521, %v713
    %v715 = vpop.f32.mrf.mxu0
    %716 = vdwg.mxu0
    %v718 = vlaneseq
    %v719 = vshrl.u32 %v718, 7
    %v720 = vsub.s32 0, %v719
    %v721 = vrot.slane %v162, %v720
    %v723 = vadd.f32 %v639, %v721
    %v724 = vadd.f32 %v644, %v721
    %v725 = vadd.f32 %v649, %v721
    %v726 = vadd.f32 %v654, %v721
    %v727 = vadd.f32 %v659, %v721
    %v728 = vadd.f32 %v664, %v721
    %v729 = vadd.f32 %v669, %v721
    %v730 = vadd.f32 %v674, %v721
    %v731 = vadd.f32 %v679, %v721
    %v732 = vadd.f32 %v684, %v721
    %v733 = vadd.f32 %v689, %v721
    %v734 = vadd.f32 %v694, %v721
    %v735 = vadd.f32 %v699, %v721
    %v736 = vadd.f32 %v704, %v721
    %v737 = vadd.f32 %v709, %v721
    %v738 = vadd.f32 %v714, %v721
    %v739 = vmin.f32 %v723, 20.0
    %v740 = vmin.f32 %v724, 20.0
    %v741 = vmin.f32 %v725, 20.0
    %v742 = vmin.f32 %v726, 20.0
    %v743 = vmin.f32 %v727, 20.0
    %v744 = vmin.f32 %v728, 20.0
    %v745 = vmin.f32 %v729, 20.0
    %v746 = vmin.f32 %v730, 20.0
    %v747 = vmin.f32 %v731, 20.0
    %v748 = vmin.f32 %v732, 20.0
    %v749 = vmin.f32 %v733, 20.0
    %v750 = vmin.f32 %v734, 20.0
    %v751 = vmin.f32 %v735, 20.0
    %v752 = vmin.f32 %v736, 20.0
    %v753 = vmin.f32 %v737, 20.0
    %v754 = vmin.f32 %v738, 20.0
    %v755 = vmul.f32 %v739, 1.442695
    %v756 = vpow.pop %v755
    %v757 = vmul.f32 %v740, 1.442695
    %v758 = vpow.pop %v757
    %v759 = vmul.f32 %v741, 1.442695
    %v760 = vpow.pop %v759
    %v761 = vmul.f32 %v742, 1.442695
    %v762 = vpow.pop %v761
    %v763 = vmul.f32 %v743, 1.442695
    %v764 = vpow.pop %v763
    %v765 = vmul.f32 %v744, 1.442695
    %v766 = vpow.pop %v765
    %v767 = vmul.f32 %v745, 1.442695
    %v768 = vpow.pop %v767
    %v769 = vmul.f32 %v746, 1.442695
    %v770 = vpow.pop %v769
    %v771 = vmul.f32 %v747, 1.442695
    %v772 = vpow.pop %v771
    %v773 = vmul.f32 %v748, 1.442695
    %v774 = vpow.pop %v773
    %v775 = vmul.f32 %v749, 1.442695
    %v776 = vpow.pop %v775
    %v777 = vmul.f32 %v750, 1.442695
    %v778 = vpow.pop %v777
    %v779 = vmul.f32 %v751, 1.442695
    %v780 = vpow.pop %v779
    %v781 = vmul.f32 %v752, 1.442695
    %v782 = vpow.pop %v781
    %v783 = vmul.f32 %v753, 1.442695
    %v784 = vpow.pop %v783
    %v785 = vmul.f32 %v754, 1.442695
    %v786 = vpow.pop %v785
    %v787 = vadd.f32 %v756, 2.0
    %v788 = vadd.f32 %v758, 2.0
    %v789 = vadd.f32 %v760, 2.0
    %v790 = vadd.f32 %v762, 2.0
    %v791 = vadd.f32 %v764, 2.0
    %v792 = vadd.f32 %v766, 2.0
    %v793 = vadd.f32 %v768, 2.0
    %v794 = vadd.f32 %v770, 2.0
    %v795 = vadd.f32 %v772, 2.0
    %v796 = vadd.f32 %v774, 2.0
    %v797 = vadd.f32 %v776, 2.0
    %v798 = vadd.f32 %v778, 2.0
    %v799 = vadd.f32 %v780, 2.0
    %v800 = vadd.f32 %v782, 2.0
    %v801 = vadd.f32 %v784, 2.0
    %v802 = vadd.f32 %v786, 2.0
    %v803 = vmul.f32 %v756, %v787
    %v804 = vmul.f32 %v758, %v788
    %v805 = vmul.f32 %v760, %v789
    %v806 = vmul.f32 %v762, %v790
    %v807 = vmul.f32 %v764, %v791
    %v808 = vmul.f32 %v766, %v792
    %v809 = vmul.f32 %v768, %v793
    %v810 = vmul.f32 %v770, %v794
    %v811 = vmul.f32 %v772, %v795
    %v812 = vmul.f32 %v774, %v796
    %v813 = vmul.f32 %v776, %v797
    %v814 = vmul.f32 %v778, %v798
    %v815 = vmul.f32 %v780, %v799
    %v816 = vmul.f32 %v782, %v800
    %v817 = vmul.f32 %v784, %v801
    %v818 = vmul.f32 %v786, %v802
    %v819 = vadd.f32 %v803, 2.0
    %v820 = vadd.f32 %v804, 2.0
    %v821 = vadd.f32 %v805, 2.0
    %v822 = vadd.f32 %v806, 2.0
    %v823 = vadd.f32 %v807, 2.0
    %v824 = vadd.f32 %v808, 2.0
    %v825 = vadd.f32 %v809, 2.0
    %v826 = vadd.f32 %v810, 2.0
    %v827 = vadd.f32 %v811, 2.0
    %v828 = vadd.f32 %v812, 2.0
    %v829 = vadd.f32 %v813, 2.0
    %v830 = vadd.f32 %v814, 2.0
    %v831 = vadd.f32 %v815, 2.0
    %v832 = vadd.f32 %v816, 2.0
    %v833 = vadd.f32 %v817, 2.0
    %v834 = vadd.f32 %v818, 2.0
    %v835 = vrcp.pop %v819
    %v836 = vrcp.pop %v820
    %v837 = vrcp.pop %v821
    %v838 = vrcp.pop %v822
    %v839 = vrcp.pop %v823
    %v840 = vrcp.pop %v824
    %v841 = vrcp.pop %v825
    %v842 = vrcp.pop %v826
    %v843 = vrcp.pop %v827
    %v844 = vrcp.pop %v828
    %v845 = vrcp.pop %v829
    %v846 = vrcp.pop %v830
    %v847 = vrcp.pop %v831
    %v848 = vrcp.pop %v832
    %v849 = vrcp.pop %v833
    %v850 = vrcp.pop %v834
    %v851 = vmul.f32 %v803, %v835
    %v852 = vmul.f32 %v804, %v836
    %v853 = vmul.f32 %v805, %v837
    %v854 = vmul.f32 %v806, %v838
    %v855 = vmul.f32 %v807, %v839
    %v856 = vmul.f32 %v808, %v840
    %v857 = vmul.f32 %v809, %v841
    %v858 = vmul.f32 %v810, %v842
    %v859 = vmul.f32 %v811, %v843
    %v860 = vmul.f32 %v812, %v844
    %v861 = vmul.f32 %v813, %v845
    %v862 = vmul.f32 %v814, %v846
    %v863 = vmul.f32 %v815, %v847
    %v864 = vmul.f32 %v816, %v848
    %v865 = vmul.f32 %v817, %v849
    %v866 = vmul.f32 %v818, %v850
    %v867 = vmul.f32 %v723, %v851
    %v868 = vmul.f32 %v724, %v852
    %v869 = vmul.f32 %v725, %v853
    %v870 = vmul.f32 %v726, %v854
    %v871 = vmul.f32 %v727, %v855
    %v872 = vmul.f32 %v728, %v856
    %v873 = vmul.f32 %v729, %v857
    %v874 = vmul.f32 %v730, %v858
    %v875 = vmul.f32 %v731, %v859
    %v876 = vmul.f32 %v732, %v860
    %v877 = vmul.f32 %v733, %v861
    %v878 = vmul.f32 %v734, %v862
    %v879 = vmul.f32 %v735, %v863
    %v880 = vmul.f32 %v736, %v864
    %v881 = vmul.f32 %v737, %v865
    %v882 = vmul.f32 %v738, %v866
    %vm883 = vcmp.gt.f32.partialorder %v723, 20.0
    %vm884 = vcmp.gt.f32.partialorder %v724, 20.0
    %vm885 = vcmp.gt.f32.partialorder %v725, 20.0
    %vm886 = vcmp.gt.f32.partialorder %v726, 20.0
    %vm887 = vcmp.gt.f32.partialorder %v727, 20.0
    %vm888 = vcmp.gt.f32.partialorder %v728, 20.0
    %vm889 = vcmp.gt.f32.partialorder %v729, 20.0
    %vm890 = vcmp.gt.f32.partialorder %v730, 20.0
    %vm891 = vcmp.gt.f32.partialorder %v731, 20.0
    %vm892 = vcmp.gt.f32.partialorder %v732, 20.0
    %vm893 = vcmp.gt.f32.partialorder %v733, 20.0
    %vm894 = vcmp.gt.f32.partialorder %v734, 20.0
    %vm895 = vcmp.gt.f32.partialorder %v735, 20.0
    %vm896 = vcmp.gt.f32.partialorder %v736, 20.0
    %vm897 = vcmp.gt.f32.partialorder %v737, 20.0
    %vm898 = vcmp.gt.f32.partialorder %v738, 20.0
    %v899 = vsel %vm883, %v723, %v867
    %v900 = vsel %vm884, %v724, %v868
    %v901 = vsel %vm885, %v725, %v869
    %v902 = vsel %vm886, %v726, %v870
    %v903 = vsel %vm887, %v727, %v871
    %v904 = vsel %vm888, %v728, %v872
    %v905 = vsel %vm889, %v729, %v873
    %v906 = vsel %vm890, %v730, %v874
    %v907 = vsel %vm891, %v731, %v875
    %v908 = vsel %vm892, %v732, %v876
    %v909 = vsel %vm893, %v733, %v877
    %v910 = vsel %vm894, %v734, %v878
    %v911 = vsel %vm895, %v735, %v879
    %v912 = vsel %vm896, %v736, %v880
    %v913 = vsel %vm897, %v737, %v881
    %v914 = vsel %vm898, %v738, %v882
    %915 = vmatprep.subr.mxu0 0.0
    %916 = vmatpush1.msra.mxu0 %v914
    %917 = vmatprep.subr.mxu0 0.0
    %918 = vmatpush1.msra.mxu0 %v913
    %919 = vmatprep.subr.mxu0 0.0
    %920 = vmatpush1.msra.mxu0 %v912
    %921 = vmatprep.subr.mxu0 0.0
    %922 = vmatpush1.msra.mxu0 %v911
    %923 = vmatprep.subr.mxu0 0.0
    %924 = vmatpush1.msra.mxu0 %v910
    %925 = vmatprep.subr.mxu0 0.0
    %926 = vmatpush1.msra.mxu0 %v909
    %927 = vmatprep.subr.mxu0 0.0
    %928 = vmatpush1.msra.mxu0 %v908
    %929 = vmatprep.subr.mxu0 0.0
    %930 = vmatpush1.msra.mxu0 %v907
    %931 = vmatprep.subr.mxu0 0.0
    %932 = vmatpush1.msra.mxu0 %v906
    %933 = vmatprep.subr.mxu0 0.0
    %934 = vmatpush1.msra.mxu0 %v905
    %935 = vmatprep.subr.mxu0 0.0
    %936 = vmatpush1.msra.mxu0 %v904
    %937 = vmatprep.subr.mxu0 0.0
    %938 = vmatpush1.msra.mxu0 %v903
    %939 = vmatprep.subr.mxu0 0.0
    %940 = vmatpush1.msra.mxu0 %v902
    %941 = vmatprep.subr.mxu0 0.0
    %942 = vmatpush1.msra.mxu0 %v901
    %943 = vmatprep.subr.mxu0 0.0
    %944 = vmatpush1.msra.mxu0 %v900
    %945 = vmatprep.subr.mxu0 0.0
    %946 = vmatpush1.msra.mxu0 %v899
    %947 = vmatprep.subr.mxu0 0.0
    %948 = vmatpush2.msra.mxu0 0.0
    %949 = vmatprep.subr.mxu0 0.0
    %950 = vmatpush2.msra.mxu0 0.0
    %951 = vmatprep.subr.mxu0 0.0
    %952 = vmatpush2.msra.mxu0 0.0
    %953 = vmatprep.subr.mxu0 0.0
    %954 = vmatpush2.msra.mxu0 0.0
    %955 = vmatprep.subr.mxu0 0.0
    %956 = vmatpush2.msra.mxu0 0.0
    %957 = vmatprep.subr.mxu0 0.0
    %958 = vmatpush2.msra.mxu0 0.0
    %959 = vmatprep.subr.mxu0 0.0
    %960 = vmatpush2.msra.mxu0 0.0
    %961 = vmatprep.subr.mxu0 0.0
    %962 = vmatpush2.msra.mxu0 0.0
    %963 = vmatprep.subr.mxu0 0.0
    %964 = vmatpush2.msra.mxu0 0.0
    %965 = vmatprep.subr.mxu0 0.0
    %966 = vmatpush2.msra.mxu0 0.0
    %967 = vmatprep.subr.mxu0 0.0
    %968 = vmatpush2.msra.mxu0 0.0
    %969 = vmatprep.subr.mxu0 0.0
    %970 = vmatpush2.msra.mxu0 0.0
    %971 = vmatprep.subr.mxu0 0.0
    %972 = vmatpush2.msra.mxu0 0.0
    %973 = vmatprep.subr.mxu0 0.0
    %974 = vmatpush2.msra.mxu0 0.0
    %975 = vmatprep.subr.mxu0 0.0
    %976 = vmatpush2.msra.mxu0 0.0
    %977 = vmatprep.subr.mxu0 0.0
    %978 = vmatpush2.msra.mxu0 0.0
    %979 = vmatprep.mubr.f32.mxu0 0.0
    %980 = vmatmul.mubr.f32.gmra.mxu0 %v146
    %v981 = vpop.f32.mrf.mxu0
    %v982 = vadd.f32 0.0, %v981
    %v983 = vpop.f32.mrf.mxu0
    %984 = vmatprep.mubr.f32.mxu0 0.0
    %985 = vmatmul.mubr.f32.gmra.mxu0 %v147
    %v986 = vpop.f32.mrf.mxu0
    %v987 = vadd.f32 0.0, %v986
    %v988 = vpop.f32.mrf.mxu0
    %989 = vmatprep.mubr.f32.mxu0 0.0
    %990 = vmatmul.mubr.f32.gmra.mxu0 %v148
    %v991 = vpop.f32.mrf.mxu0
    %v992 = vadd.f32 0.0, %v991
    %v993 = vpop.f32.mrf.mxu0
    %994 = vmatprep.mubr.f32.mxu0 0.0
    %995 = vmatmul.mubr.f32.gmra.mxu0 %v149
    %v996 = vpop.f32.mrf.mxu0
    %v997 = vadd.f32 0.0, %v996
    %v998 = vpop.f32.mrf.mxu0
    %999 = vmatprep.mubr.f32.mxu0 0.0
    %1000 = vmatmul.mubr.f32.gmra.mxu0 %v150
    %v1001 = vpop.f32.mrf.mxu0
    %v1002 = vadd.f32 0.0, %v1001
    %v1003 = vpop.f32.mrf.mxu0
    %1004 = vmatprep.mubr.f32.mxu0 0.0
    %1005 = vmatmul.mubr.f32.gmra.mxu0 %v151
    %v1006 = vpop.f32.mrf.mxu0
    %v1007 = vadd.f32 0.0, %v1006
    %v1008 = vpop.f32.mrf.mxu0
    %1009 = vmatprep.mubr.f32.mxu0 0.0
    %1010 = vmatmul.mubr.f32.gmra.mxu0 %v152
    %v1011 = vpop.f32.mrf.mxu0
    %v1012 = vadd.f32 0.0, %v1011
    %v1013 = vpop.f32.mrf.mxu0
    %1014 = vmatprep.mubr.f32.mxu0 0.0
    %1015 = vmatmul.mubr.f32.gmra.mxu0 %v153
    %v1016 = vpop.f32.mrf.mxu0
    %v1017 = vadd.f32 0.0, %v1016
    %v1018 = vpop.f32.mrf.mxu0
    %1019 = vmatprep.mubr.f32.mxu0 0.0
    %1020 = vmatmul.mubr.f32.gmra.mxu0 %v154
    %v1021 = vpop.f32.mrf.mxu0
    %v1022 = vadd.f32 0.0, %v1021
    %v1023 = vpop.f32.mrf.mxu0
    %1024 = vmatprep.mubr.f32.mxu0 0.0
    %1025 = vmatmul.mubr.f32.gmra.mxu0 %v155
    %v1026 = vpop.f32.mrf.mxu0
    %v1027 = vadd.f32 0.0, %v1026
    %v1028 = vpop.f32.mrf.mxu0
    %1029 = vmatprep.mubr.f32.mxu0 0.0
    %1030 = vmatmul.mubr.f32.gmra.mxu0 %v156
    %v1031 = vpop.f32.mrf.mxu0
    %v1032 = vadd.f32 0.0, %v1031
    %v1033 = vpop.f32.mrf.mxu0
    %1034 = vmatprep.mubr.f32.mxu0 0.0
    %1035 = vmatmul.mubr.f32.gmra.mxu0 %v157
    %v1036 = vpop.f32.mrf.mxu0
    %v1037 = vadd.f32 0.0, %v1036
    %v1038 = vpop.f32.mrf.mxu0
    %1039 = vmatprep.mubr.f32.mxu0 0.0
    %1040 = vmatmul.mubr.f32.gmra.mxu0 %v158
    %v1041 = vpop.f32.mrf.mxu0
    %v1042 = vadd.f32 0.0, %v1041
    %v1043 = vpop.f32.mrf.mxu0
    %1044 = vmatprep.mubr.f32.mxu0 0.0
    %1045 = vmatmul.mubr.f32.gmra.mxu0 %v159
    %v1046 = vpop.f32.mrf.mxu0
    %v1047 = vadd.f32 0.0, %v1046
    %v1048 = vpop.f32.mrf.mxu0
    %1049 = vmatprep.mubr.f32.mxu0 0.0
    %1050 = vmatmul.mubr.f32.gmra.mxu0 %v160
    %v1051 = vpop.f32.mrf.mxu0
    %v1052 = vadd.f32 0.0, %v1051
    %v1053 = vpop.f32.mrf.mxu0
    %1054 = vmatprep.mubr.f32.mxu0 0.0
    %1055 = vmatmul.mubr.f32.gmra.mxu0 %v161
    %v1056 = vpop.f32.mrf.mxu0
    %v1057 = vadd.f32 0.0, %v1056
    %v1058 = vpop.f32.mrf.mxu0
    %1059 = vdwg.mxu0
    %v1060 = vld [vmem:[%s3] sm:$0xff]
    %v1061 = vld [vmem:[%s3 + $0x8] sm:$0xff]
    %v1062 = vld [vmem:[%s3 + $0x10] sm:$0xff]
    %v1063 = vld [vmem:[%s3 + $0x18] sm:$0xff]
    %s1064 = scalar_lea.vmem %s3, 32
    %v1065 = vld [vmem:[%s1064] sm:$0xff]
    %v1066 = vld [vmem:[%s1064 + $0x8] sm:$0xff]
    %v1067 = vld [vmem:[%s1064 + $0x10] sm:$0xff]
    %v1068 = vld [vmem:[%s1064 + $0x18] sm:$0xff]
    %vm1069 = vcmask 261120
    %v1071 = vsel %vm1069, %v982, 0
    %v1074 = vsel %vm1069, %v987, 0
    %v1077 = vsel %vm1069, %v992, 0
    %v1080 = vsel %vm1069, %v997, 0
    %v1083 = vsel %vm1069, %v1002, 0
    %v1086 = vsel %vm1069, %v1007, 0
    %v1089 = vsel %vm1069, %v1012, 0
    %v1092 = vsel %vm1069, %v1017, 0
    %v1095 = vsel %vm1069, %v1022, 0
    %v1098 = vsel %vm1069, %v1027, 0
    %v1101 = vsel %vm1069, %v1032, 0
    %v1104 = vsel %vm1069, %v1037, 0
    %v1107 = vsel %vm1069, %v1042, 0
    %v1110 = vsel %vm1069, %v1047, 0
    %v1113 = vsel %vm1069, %v1052, 0
    %v1116 = vsel %vm1069, %v1057, 0
    %1118 = vmatprep.subr.mxu0 0.0
    %1119 = vmatpush1.msra.mxu0 0.0
    %1120 = vmatprep.subr.mxu0 0.0
    %1121 = vmatpush1.msra.mxu0 0.0
    %1122 = vmatprep.subr.mxu0 0.0
    %1123 = vmatpush1.msra.mxu0 0.0
    %1124 = vmatprep.subr.mxu0 0.0
    %1125 = vmatpush1.msra.mxu0 0.0
    %1126 = vmatprep.subr.mxu0 0.0
    %1127 = vmatpush1.msra.mxu0 0.0
    %1128 = vmatprep.subr.mxu0 0.0
    %1129 = vmatpush1.msra.mxu0 0.0
    %1130 = vmatprep.subr.mxu0 0.0
    %1131 = vmatpush1.msra.mxu0 0.0
    %1132 = vmatprep.subr.mxu0 0.0
    %1133 = vmatpush1.msra.mxu0 0.0
    %1134 = vmatprep.subr.mxu0 0.0
    %1135 = vmatpush1.msra.mxu0 0.0
    %1136 = vmatprep.subr.mxu0 0.0
    %1137 = vmatpush1.msra.mxu0 0.0
    %1138 = vmatprep.subr.mxu0 0.0
    %1139 = vmatpush1.msra.mxu0 0.0
    %1140 = vmatprep.subr.mxu0 0.0
    %1141 = vmatpush1.msra.mxu0 0.0
    %1142 = vmatprep.subr.mxu0 0.0
    %1143 = vmatpush1.msra.mxu0 %v1068
    %1144 = vmatprep.subr.mxu0 0.0
    %1145 = vmatpush1.msra.mxu0 %v1067
    %1146 = vmatprep.subr.mxu0 0.0
    %1147 = vmatpush1.msra.mxu0 %v1066
    %1148 = vmatprep.subr.mxu0 0.0
    %1149 = vmatpush1.msra.mxu0 %v1065
    %1150 = vmatprep.subr.mxu0 0.0
    %1151 = vmatpush2.msra.mxu0 0.0
    %1152 = vmatprep.subr.mxu0 0.0
    %1153 = vmatpush2.msra.mxu0 0.0
    %1154 = vmatprep.subr.mxu0 0.0
    %1155 = vmatpush2.msra.mxu0 0.0
    %1156 = vmatprep.subr.mxu0 0.0
    %1157 = vmatpush2.msra.mxu0 0.0
    %1158 = vmatprep.subr.mxu0 0.0
    %1159 = vmatpush2.msra.mxu0 0.0
    %1160 = vmatprep.subr.mxu0 0.0
    %1161 = vmatpush2.msra.mxu0 0.0
    %1162 = vmatprep.subr.mxu0 0.0
    %1163 = vmatpush2.msra.mxu0 0.0
    %1164 = vmatprep.subr.mxu0 0.0
    %1165 = vmatpush2.msra.mxu0 0.0
    %1166 = vmatprep.subr.mxu0 0.0
    %1167 = vmatpush2.msra.mxu0 0.0
    %1168 = vmatprep.subr.mxu0 0.0
    %1169 = vmatpush2.msra.mxu0 0.0
    %1170 = vmatprep.subr.mxu0 0.0
    %1171 = vmatpush2.msra.mxu0 0.0
    %1172 = vmatprep.subr.mxu0 0.0
    %1173 = vmatpush2.msra.mxu0 0.0
    %1174 = vmatprep.subr.mxu0 0.0
    %1175 = vmatpush2.msra.mxu0 0.0
    %1176 = vmatprep.subr.mxu0 0.0
    %1177 = vmatpush2.msra.mxu0 0.0
    %1178 = vmatprep.subr.mxu0 0.0
    %1179 = vmatpush2.msra.mxu0 0.0
    %1180 = vmatprep.subr.mxu0 0.0
    %1181 = vmatpush2.msra.mxu0 0.0
    %1182 = vmatprep.mubr.f32.mxu0 0.0
    %1183 = vmatmul.mubr.f32.gmra.mxu0 %v1071
    %v1184 = vpop.f32.mrf.mxu0
    %v1185 = vadd.f32 0.0, %v1184
    %v1186 = vpop.f32.mrf.mxu0
    %1187 = vmatprep.mubr.f32.mxu0 0.0
    %1188 = vmatmul.mubr.f32.gmra.mxu0 %v1074
    %v1189 = vpop.f32.mrf.mxu0
    %v1190 = vadd.f32 0.0, %v1189
    %v1191 = vpop.f32.mrf.mxu0
    %1192 = vmatprep.mubr.f32.mxu0 0.0
    %1193 = vmatmul.mubr.f32.gmra.mxu0 %v1077
    %v1194 = vpop.f32.mrf.mxu0
    %v1195 = vadd.f32 0.0, %v1194
    %v1196 = vpop.f32.mrf.mxu0
    %1197 = vmatprep.mubr.f32.mxu0 0.0
    %1198 = vmatmul.mubr.f32.gmra.mxu0 %v1080
    %v1199 = vpop.f32.mrf.mxu0
    %v1200 = vadd.f32 0.0, %v1199
    %v1201 = vpop.f32.mrf.mxu0
    %1202 = vmatprep.mubr.f32.mxu0 0.0
    %1203 = vmatmul.mubr.f32.gmra.mxu0 %v1083
    %v1204 = vpop.f32.mrf.mxu0
    %v1205 = vadd.f32 0.0, %v1204
    %v1206 = vpop.f32.mrf.mxu0
    %1207 = vmatprep.mubr.f32.mxu0 0.0
    %1208 = vmatmul.mubr.f32.gmra.mxu0 %v1086
    %v1209 = vpop.f32.mrf.mxu0
    %v1210 = vadd.f32 0.0, %v1209
    %v1211 = vpop.f32.mrf.mxu0
    %1212 = vmatprep.mubr.f32.mxu0 0.0
    %1213 = vmatmul.mubr.f32.gmra.mxu0 %v1089
    %v1214 = vpop.f32.mrf.mxu0
    %v1215 = vadd.f32 0.0, %v1214
    %v1216 = vpop.f32.mrf.mxu0
    %1217 = vmatprep.mubr.f32.mxu0 0.0
    %1218 = vmatmul.mubr.f32.gmra.mxu0 %v1092
    %v1219 = vpop.f32.mrf.mxu0
    %v1220 = vadd.f32 0.0, %v1219
    %v1221 = vpop.f32.mrf.mxu0
    %1222 = vmatprep.mubr.f32.mxu0 0.0
    %1223 = vmatmul.mubr.f32.gmra.mxu0 %v1095
    %v1224 = vpop.f32.mrf.mxu0
    %v1225 = vadd.f32 0.0, %v1224
    %v1226 = vpop.f32.mrf.mxu0
    %1227 = vmatprep.mubr.f32.mxu0 0.0
    %1228 = vmatmul.mubr.f32.gmra.mxu0 %v1098
    %v1229 = vpop.f32.mrf.mxu0
    %v1230 = vadd.f32 0.0, %v1229
    %v1231 = vpop.f32.mrf.mxu0
    %1232 = vmatprep.mubr.f32.mxu0 0.0
    %1233 = vmatmul.mubr.f32.gmra.mxu0 %v1101
    %v1234 = vpop.f32.mrf.mxu0
    %v1235 = vadd.f32 0.0, %v1234
    %v1236 = vpop.f32.mrf.mxu0
    %1237 = vmatprep.mubr.f32.mxu0 0.0
    %1238 = vmatmul.mubr.f32.gmra.mxu0 %v1104
    %v1239 = vpop.f32.mrf.mxu0
    %v1240 = vadd.f32 0.0, %v1239
    %v1241 = vpop.f32.mrf.mxu0
    %1242 = vmatprep.mubr.f32.mxu0 0.0
    %1243 = vmatmul.mubr.f32.gmra.mxu0 %v1107
    %v1244 = vpop.f32.mrf.mxu0
    %v1245 = vadd.f32 0.0, %v1244
    %v1246 = vpop.f32.mrf.mxu0
    %1247 = vmatprep.mubr.f32.mxu0 0.0
    %1248 = vmatmul.mubr.f32.gmra.mxu0 %v1110
    %v1249 = vpop.f32.mrf.mxu0
    %v1250 = vadd.f32 0.0, %v1249
    %v1251 = vpop.f32.mrf.mxu0
    %1252 = vmatprep.mubr.f32.mxu0 0.0
    %1253 = vmatmul.mubr.f32.gmra.mxu0 %v1113
    %v1254 = vpop.f32.mrf.mxu0
    %v1255 = vadd.f32 0.0, %v1254
    %v1256 = vpop.f32.mrf.mxu0
    %1257 = vmatprep.mubr.f32.mxu0 0.0
    %1258 = vmatmul.mubr.f32.gmra.mxu0 %v1116
    %v1259 = vpop.f32.mrf.mxu0
    %v1260 = vadd.f32 0.0, %v1259
    %v1261 = vpop.f32.mrf.mxu0
    %1262 = vdwg.mxu0
    %v1264 = vsel %vm1069, %v899, 0
    %v1267 = vsel %vm1069, %v900, 0
    %v1270 = vsel %vm1069, %v901, 0
    %v1273 = vsel %vm1069, %v902, 0
    %v1276 = vsel %vm1069, %v903, 0
    %v1279 = vsel %vm1069, %v904, 0
    %v1282 = vsel %vm1069, %v905, 0
    %v1285 = vsel %vm1069, %v906, 0
    %v1288 = vsel %vm1069, %v907, 0
    %v1291 = vsel %vm1069, %v908, 0
    %v1294 = vsel %vm1069, %v909, 0
    %v1297 = vsel %vm1069, %v910, 0
    %v1300 = vsel %vm1069, %v911, 0
    %v1303 = vsel %vm1069, %v912, 0
    %v1306 = vsel %vm1069, %v913, 0
    %v1309 = vsel %vm1069, %v914, 0
    %1311 = vmatprep.subr.mxu0 0.0
    %1312 = vmatpush1.msra.mxu0 0.0
    %1313 = vmatprep.subr.mxu0 0.0
    %1314 = vmatpush1.msra.mxu0 0.0
    %1315 = vmatprep.subr.mxu0 0.0
    %1316 = vmatpush1.msra.mxu0 0.0
    %1317 = vmatprep.subr.mxu0 0.0
    %1318 = vmatpush1.msra.mxu0 0.0
    %1319 = vmatprep.subr.mxu0 0.0
    %1320 = vmatpush1.msra.mxu0 0.0
    %1321 = vmatprep.subr.mxu0 0.0
    %1322 = vmatpush1.msra.mxu0 0.0
    %1323 = vmatprep.subr.mxu0 0.0
    %1324 = vmatpush1.msra.mxu0 0.0
    %1325 = vmatprep.subr.mxu0 0.0
    %1326 = vmatpush1.msra.mxu0 0.0
    %1327 = vmatprep.subr.mxu0 0.0
    %1328 = vmatpush1.msra.mxu0 0.0
    %1329 = vmatprep.subr.mxu0 0.0
    %1330 = vmatpush1.msra.mxu0 0.0
    %1331 = vmatprep.subr.mxu0 0.0
    %1332 = vmatpush1.msra.mxu0 0.0
    %1333 = vmatprep.subr.mxu0 0.0
    %1334 = vmatpush1.msra.mxu0 0.0
    %1335 = vmatprep.subr.mxu0 0.0
    %1336 = vmatpush1.msra.mxu0 %v1063
    %1337 = vmatprep.subr.mxu0 0.0
    %1338 = vmatpush1.msra.mxu0 %v1062
    %1339 = vmatprep.subr.mxu0 0.0
    %1340 = vmatpush1.msra.mxu0 %v1061
    %1341 = vmatprep.subr.mxu0 0.0
    %1342 = vmatpush1.msra.mxu0 %v1060
    %1343 = vmatprep.subr.mxu0 0.0
    %1344 = vmatpush2.msra.mxu0 0.0
    %1345 = vmatprep.subr.mxu0 0.0
    %1346 = vmatpush2.msra.mxu0 0.0
    %1347 = vmatprep.subr.mxu0 0.0
    %1348 = vmatpush2.msra.mxu0 0.0
    %1349 = vmatprep.subr.mxu0 0.0
    %1350 = vmatpush2.msra.mxu0 0.0
    %1351 = vmatprep.subr.mxu0 0.0
    %1352 = vmatpush2.msra.mxu0 0.0
    %1353 = vmatprep.subr.mxu0 0.0
    %1354 = vmatpush2.msra.mxu0 0.0
    %1355 = vmatprep.subr.mxu0 0.0
    %1356 = vmatpush2.msra.mxu0 0.0
    %1357 = vmatprep.subr.mxu0 0.0
    %1358 = vmatpush2.msra.mxu0 0.0
    %1359 = vmatprep.subr.mxu0 0.0
    %1360 = vmatpush2.msra.mxu0 0.0
    %1361 = vmatprep.subr.mxu0 0.0
    %1362 = vmatpush2.msra.mxu0 0.0
    %1363 = vmatprep.subr.mxu0 0.0
    %1364 = vmatpush2.msra.mxu0 0.0
    %1365 = vmatprep.subr.mxu0 0.0
    %1366 = vmatpush2.msra.mxu0 0.0
    %1367 = vmatprep.subr.mxu0 0.0
    %1368 = vmatpush2.msra.mxu0 0.0
    %1369 = vmatprep.subr.mxu0 0.0
    %1370 = vmatpush2.msra.mxu0 0.0
    %1371 = vmatprep.subr.mxu0 0.0
    %1372 = vmatpush2.msra.mxu0 0.0
    %1373 = vmatprep.subr.mxu0 0.0
    %1374 = vmatpush2.msra.mxu0 0.0
    %1375 = vmatprep.mubr.f32.mxu0 0.0
    %1376 = vmatmul.mubr.f32.gmra.mxu0 %v1264
    %v1377 = vpop.f32.mrf.mxu0
    %v1378 = vadd.f32 %v1185, %v1377
    %v1379 = vpop.f32.mrf.mxu0
    %1380 = vmatprep.mubr.f32.mxu0 0.0
    %1381 = vmatmul.mubr.f32.gmra.mxu0 %v1267
    %v1382 = vpop.f32.mrf.mxu0
    %v1383 = vadd.f32 %v1190, %v1382
    %v1384 = vpop.f32.mrf.mxu0
    %1385 = vmatprep.mubr.f32.mxu0 0.0
    %1386 = vmatmul.mubr.f32.gmra.mxu0 %v1270
    %v1387 = vpop.f32.mrf.mxu0
    %v1388 = vadd.f32 %v1195, %v1387
    %v1389 = vpop.f32.mrf.mxu0
    %1390 = vmatprep.mubr.f32.mxu0 0.0
    %1391 = vmatmul.mubr.f32.gmra.mxu0 %v1273
    %v1392 = vpop.f32.mrf.mxu0
    %v1393 = vadd.f32 %v1200, %v1392
    %v1394 = vpop.f32.mrf.mxu0
    %1395 = vmatprep.mubr.f32.mxu0 0.0
    %1396 = vmatmul.mubr.f32.gmra.mxu0 %v1276
    %v1397 = vpop.f32.mrf.mxu0
    %v1398 = vadd.f32 %v1205, %v1397
    %v1399 = vpop.f32.mrf.mxu0
    %1400 = vmatprep.mubr.f32.mxu0 0.0
    %1401 = vmatmul.mubr.f32.gmra.mxu0 %v1279
    %v1402 = vpop.f32.mrf.mxu0
    %v1403 = vadd.f32 %v1210, %v1402
    %v1404 = vpop.f32.mrf.mxu0
    %1405 = vmatprep.mubr.f32.mxu0 0.0
    %1406 = vmatmul.mubr.f32.gmra.mxu0 %v1282
    %v1407 = vpop.f32.mrf.mxu0
    %v1408 = vadd.f32 %v1215, %v1407
    %v1409 = vpop.f32.mrf.mxu0
    %1410 = vmatprep.mubr.f32.mxu0 0.0
    %1411 = vmatmul.mubr.f32.gmra.mxu0 %v1285
    %v1412 = vpop.f32.mrf.mxu0
    %v1413 = vadd.f32 %v1220, %v1412
    %v1414 = vpop.f32.mrf.mxu0
    %1415 = vmatprep.mubr.f32.mxu0 0.0
    %1416 = vmatmul.mubr.f32.gmra.mxu0 %v1288
    %v1417 = vpop.f32.mrf.mxu0
    %v1418 = vadd.f32 %v1225, %v1417
    %v1419 = vpop.f32.mrf.mxu0
    %1420 = vmatprep.mubr.f32.mxu0 0.0
    %1421 = vmatmul.mubr.f32.gmra.mxu0 %v1291
    %v1422 = vpop.f32.mrf.mxu0
    %v1423 = vadd.f32 %v1230, %v1422
    %v1424 = vpop.f32.mrf.mxu0
    %1425 = vmatprep.mubr.f32.mxu0 0.0
    %1426 = vmatmul.mubr.f32.gmra.mxu0 %v1294
    %v1427 = vpop.f32.mrf.mxu0
    %v1428 = vadd.f32 %v1235, %v1427
    %v1429 = vpop.f32.mrf.mxu0
    %1430 = vmatprep.mubr.f32.mxu0 0.0
    %1431 = vmatmul.mubr.f32.gmra.mxu0 %v1297
    %v1432 = vpop.f32.mrf.mxu0
    %v1433 = vadd.f32 %v1240, %v1432
    %v1434 = vpop.f32.mrf.mxu0
    %1435 = vmatprep.mubr.f32.mxu0 0.0
    %1436 = vmatmul.mubr.f32.gmra.mxu0 %v1300
    %v1437 = vpop.f32.mrf.mxu0
    %v1438 = vadd.f32 %v1245, %v1437
    %v1439 = vpop.f32.mrf.mxu0
    %1440 = vmatprep.mubr.f32.mxu0 0.0
    %1441 = vmatmul.mubr.f32.gmra.mxu0 %v1303
    %v1442 = vpop.f32.mrf.mxu0
    %v1443 = vadd.f32 %v1250, %v1442
    %v1444 = vpop.f32.mrf.mxu0
    %1445 = vmatprep.mubr.f32.mxu0 0.0
    %1446 = vmatmul.mubr.f32.gmra.mxu0 %v1306
    %v1447 = vpop.f32.mrf.mxu0
    %v1448 = vadd.f32 %v1255, %v1447
    %v1449 = vpop.f32.mrf.mxu0
    %1450 = vmatprep.mubr.f32.mxu0 0.0
    %1451 = vmatmul.mubr.f32.gmra.mxu0 %v1309
    %v1452 = vpop.f32.mrf.mxu0
    %v1453 = vadd.f32 %v1260, %v1452
    %v1454 = vpop.f32.mrf.mxu0
    %1455 = vdwg.mxu0
    %1456 = vrot.lane.b32.xlu0 %v721, 96
    %v1457 = vpop.permute.xlu0 %1456
    %v1459 = vadd.f32 %v1378, %v1457
    %v1460 = vadd.f32 %v1383, %v1457
    %v1461 = vadd.f32 %v1388, %v1457
    %v1462 = vadd.f32 %v1393, %v1457
    %v1463 = vadd.f32 %v1398, %v1457
    %v1464 = vadd.f32 %v1403, %v1457
    %v1465 = vadd.f32 %v1408, %v1457
    %v1466 = vadd.f32 %v1413, %v1457
    %v1467 = vadd.f32 %v1418, %v1457
    %v1468 = vadd.f32 %v1423, %v1457
    %v1469 = vadd.f32 %v1428, %v1457
    %v1470 = vadd.f32 %v1433, %v1457
    %v1471 = vadd.f32 %v1438, %v1457
    %v1472 = vadd.f32 %v1443, %v1457
    %v1473 = vadd.f32 %v1448, %v1457
    %v1474 = vadd.f32 %v1453, %v1457
    %v1475 = vmin.f32 %v1459, 20.0
    %v1476 = vmin.f32 %v1460, 20.0
    %v1477 = vmin.f32 %v1461, 20.0
    %v1478 = vmin.f32 %v1462, 20.0
    %v1479 = vmin.f32 %v1463, 20.0
    %v1480 = vmin.f32 %v1464, 20.0
    %v1481 = vmin.f32 %v1465, 20.0
    %v1482 = vmin.f32 %v1466, 20.0
    %v1483 = vmin.f32 %v1467, 20.0
    %v1484 = vmin.f32 %v1468, 20.0
    %v1485 = vmin.f32 %v1469, 20.0
    %v1486 = vmin.f32 %v1470, 20.0
    %v1487 = vmin.f32 %v1471, 20.0
    %v1488 = vmin.f32 %v1472, 20.0
    %v1489 = vmin.f32 %v1473, 20.0
    %v1490 = vmin.f32 %v1474, 20.0
    %v1491 = vmul.f32 %v1475, 1.442695
    %v1492 = vpow.pop %v1491
    %v1493 = vmul.f32 %v1476, 1.442695
    %v1494 = vpow.pop %v1493
    %v1495 = vmul.f32 %v1477, 1.442695
    %v1496 = vpow.pop %v1495
    %v1497 = vmul.f32 %v1478, 1.442695
    %v1498 = vpow.pop %v1497
    %v1499 = vmul.f32 %v1479, 1.442695
    %v1500 = vpow.pop %v1499
    %v1501 = vmul.f32 %v1480, 1.442695
    %v1502 = vpow.pop %v1501
    %v1503 = vmul.f32 %v1481, 1.442695
    %v1504 = vpow.pop %v1503
    %v1505 = vmul.f32 %v1482, 1.442695
    %v1506 = vpow.pop %v1505
    %v1507 = vmul.f32 %v1483, 1.442695
    %v1508 = vpow.pop %v1507
    %v1509 = vmul.f32 %v1484, 1.442695
    %v1510 = vpow.pop %v1509
    %v1511 = vmul.f32 %v1485, 1.442695
    %v1512 = vpow.pop %v1511
    %v1513 = vmul.f32 %v1486, 1.442695
    %v1514 = vpow.pop %v1513
    %v1515 = vmul.f32 %v1487, 1.442695
    %v1516 = vpow.pop %v1515
    %v1517 = vmul.f32 %v1488, 1.442695
    %v1518 = vpow.pop %v1517
    %v1519 = vmul.f32 %v1489, 1.442695
    %v1520 = vpow.pop %v1519
    %v1521 = vmul.f32 %v1490, 1.442695
    %v1522 = vpow.pop %v1521
    %v1523 = vadd.f32 %v1492, 2.0
    %v1524 = vadd.f32 %v1494, 2.0
    %v1525 = vadd.f32 %v1496, 2.0
    %v1526 = vadd.f32 %v1498, 2.0
    %v1527 = vadd.f32 %v1500, 2.0
    %v1528 = vadd.f32 %v1502, 2.0
    %v1529 = vadd.f32 %v1504, 2.0
    %v1530 = vadd.f32 %v1506, 2.0
    %v1531 = vadd.f32 %v1508, 2.0
    %v1532 = vadd.f32 %v1510, 2.0
    %v1533 = vadd.f32 %v1512, 2.0
    %v1534 = vadd.f32 %v1514, 2.0
    %v1535 = vadd.f32 %v1516, 2.0
    %v1536 = vadd.f32 %v1518, 2.0
    %v1537 = vadd.f32 %v1520, 2.0
    %v1538 = vadd.f32 %v1522, 2.0
    %v1539 = vmul.f32 %v1492, %v1523
    %v1540 = vmul.f32 %v1494, %v1524
    %v1541 = vmul.f32 %v1496, %v1525
    %v1542 = vmul.f32 %v1498, %v1526
    %v1543 = vmul.f32 %v1500, %v1527
    %v1544 = vmul.f32 %v1502, %v1528
    %v1545 = vmul.f32 %v1504, %v1529
    %v1546 = vmul.f32 %v1506, %v1530
    %v1547 = vmul.f32 %v1508, %v1531
    %v1548 = vmul.f32 %v1510, %v1532
    %v1549 = vmul.f32 %v1512, %v1533
    %v1550 = vmul.f32 %v1514, %v1534
    %v1551 = vmul.f32 %v1516, %v1535
    %v1552 = vmul.f32 %v1518, %v1536
    %v1553 = vmul.f32 %v1520, %v1537
    %v1554 = vmul.f32 %v1522, %v1538
    %v1555 = vadd.f32 %v1539, 2.0
    %v1556 = vadd.f32 %v1540, 2.0
    %v1557 = vadd.f32 %v1541, 2.0
    %v1558 = vadd.f32 %v1542, 2.0
    %v1559 = vadd.f32 %v1543, 2.0
    %v1560 = vadd.f32 %v1544, 2.0
    %v1561 = vadd.f32 %v1545, 2.0
    %v1562 = vadd.f32 %v1546, 2.0
    %v1563 = vadd.f32 %v1547, 2.0
    %v1564 = vadd.f32 %v1548, 2.0
    %v1565 = vadd.f32 %v1549, 2.0
    %v1566 = vadd.f32 %v1550, 2.0
    %v1567 = vadd.f32 %v1551, 2.0
    %v1568 = vadd.f32 %v1552, 2.0
    %v1569 = vadd.f32 %v1553, 2.0
    %v1570 = vadd.f32 %v1554, 2.0
    %v1571 = vrcp.pop %v1555
    %v1572 = vrcp.pop %v1556
    %v1573 = vrcp.pop %v1557
    %v1574 = vrcp.pop %v1558
    %v1575 = vrcp.pop %v1559
    %v1576 = vrcp.pop %v1560
    %v1577 = vrcp.pop %v1561
    %v1578 = vrcp.pop %v1562
    %v1579 = vrcp.pop %v1563
    %v1580 = vrcp.pop %v1564
    %v1581 = vrcp.pop %v1565
    %v1582 = vrcp.pop %v1566
    %v1583 = vrcp.pop %v1567
    %v1584 = vrcp.pop %v1568
    %v1585 = vrcp.pop %v1569
    %v1586 = vrcp.pop %v1570
    %v1587 = vmul.f32 %v1539, %v1571
    %v1588 = vmul.f32 %v1540, %v1572
    %v1589 = vmul.f32 %v1541, %v1573
    %v1590 = vmul.f32 %v1542, %v1574
    %v1591 = vmul.f32 %v1543, %v1575
    %v1592 = vmul.f32 %v1544, %v1576
    %v1593 = vmul.f32 %v1545, %v1577
    %v1594 = vmul.f32 %v1546, %v1578
    %v1595 = vmul.f32 %v1547, %v1579
    %v1596 = vmul.f32 %v1548, %v1580
    %v1597 = vmul.f32 %v1549, %v1581
    %v1598 = vmul.f32 %v1550, %v1582
    %v1599 = vmul.f32 %v1551, %v1583
    %v1600 = vmul.f32 %v1552, %v1584
    %v1601 = vmul.f32 %v1553, %v1585
    %v1602 = vmul.f32 %v1554, %v1586
    %v1603 = vmul.f32 %v1459, %v1587
    %v1604 = vmul.f32 %v1460, %v1588
    %v1605 = vmul.f32 %v1461, %v1589
    %v1606 = vmul.f32 %v1462, %v1590
    %v1607 = vmul.f32 %v1463, %v1591
    %v1608 = vmul.f32 %v1464, %v1592
    %v1609 = vmul.f32 %v1465, %v1593
    %v1610 = vmul.f32 %v1466, %v1594
    %v1611 = vmul.f32 %v1467, %v1595
    %v1612 = vmul.f32 %v1468, %v1596
    %v1613 = vmul.f32 %v1469, %v1597
    %v1614 = vmul.f32 %v1470, %v1598
    %v1615 = vmul.f32 %v1471, %v1599
    %v1616 = vmul.f32 %v1472, %v1600
    %v1617 = vmul.f32 %v1473, %v1601
    %v1618 = vmul.f32 %v1474, %v1602
    %vm1619 = vcmp.gt.f32.partialorder %v1459, 20.0
    %vm1620 = vcmp.gt.f32.partialorder %v1460, 20.0
    %vm1621 = vcmp.gt.f32.partialorder %v1461, 20.0
    %vm1622 = vcmp.gt.f32.partialorder %v1462, 20.0
    %vm1623 = vcmp.gt.f32.partialorder %v1463, 20.0
    %vm1624 = vcmp.gt.f32.partialorder %v1464, 20.0
    %vm1625 = vcmp.gt.f32.partialorder %v1465, 20.0
    %vm1626 = vcmp.gt.f32.partialorder %v1466, 20.0
    %vm1627 = vcmp.gt.f32.partialorder %v1467, 20.0
    %vm1628 = vcmp.gt.f32.partialorder %v1468, 20.0
    %vm1629 = vcmp.gt.f32.partialorder %v1469, 20.0
    %vm1630 = vcmp.gt.f32.partialorder %v1470, 20.0
    %vm1631 = vcmp.gt.f32.partialorder %v1471, 20.0
    %vm1632 = vcmp.gt.f32.partialorder %v1472, 20.0
    %vm1633 = vcmp.gt.f32.partialorder %v1473, 20.0
    %vm1634 = vcmp.gt.f32.partialorder %v1474, 20.0
    %v1635 = vsel %vm1619, %v1459, %v1603
    %v1636 = vsel %vm1620, %v1460, %v1604
    %v1637 = vsel %vm1621, %v1461, %v1605
    %v1638 = vsel %vm1622, %v1462, %v1606
    %v1639 = vsel %vm1623, %v1463, %v1607
    %v1640 = vsel %vm1624, %v1464, %v1608
    %v1641 = vsel %vm1625, %v1465, %v1609
    %v1642 = vsel %vm1626, %v1466, %v1610
    %v1643 = vsel %vm1627, %v1467, %v1611
    %v1644 = vsel %vm1628, %v1468, %v1612
    %v1645 = vsel %vm1629, %v1469, %v1613
    %v1646 = vsel %vm1630, %v1470, %v1614
    %v1647 = vsel %vm1631, %v1471, %v1615
    %v1648 = vsel %vm1632, %v1472, %v1616
    %v1649 = vsel %vm1633, %v1473, %v1617
    %v1650 = vsel %vm1634, %v1474, %v1618
    %v1651 = vld [vmem:[%s4] sm:$0xff]
    %v1652 = vld [vmem:[%s4 + $0x8] sm:$0xff]
    %v1653 = vld [vmem:[%s4 + $0x10] sm:$0xff]
    %v1654 = vld [vmem:[%s4 + $0x18] sm:$0xff]
    %v1656 = vsel %vm1069, %v1635, 0
    %v1659 = vsel %vm1069, %v1636, 0
    %v1662 = vsel %vm1069, %v1637, 0
    %v1665 = vsel %vm1069, %v1638, 0
    %v1668 = vsel %vm1069, %v1639, 0
    %v1671 = vsel %vm1069, %v1640, 0
    %v1674 = vsel %vm1069, %v1641, 0
    %v1677 = vsel %vm1069, %v1642, 0
    %v1680 = vsel %vm1069, %v1643, 0
    %v1683 = vsel %vm1069, %v1644, 0
    %v1686 = vsel %vm1069, %v1645, 0
    %v1689 = vsel %vm1069, %v1646, 0
    %v1692 = vsel %vm1069, %v1647, 0
    %v1695 = vsel %vm1069, %v1648, 0
    %v1698 = vsel %vm1069, %v1649, 0
    %v1701 = vsel %vm1069, %v1650, 0
    %1703 = vmatprep.subr.mxu0 0.0
    %1704 = vmatpush1.msra.mxu0 0.0
    %1705 = vmatprep.subr.mxu0 0.0
    %1706 = vmatpush1.msra.mxu0 0.0
    %1707 = vmatprep.subr.mxu0 0.0
    %1708 = vmatpush1.msra.mxu0 0.0
    %1709 = vmatprep.subr.mxu0 0.0
    %1710 = vmatpush1.msra.mxu0 0.0
    %1711 = vmatprep.subr.mxu0 0.0
    %1712 = vmatpush1.msra.mxu0 0.0
    %1713 = vmatprep.subr.mxu0 0.0
    %1714 = vmatpush1.msra.mxu0 0.0
    %1715 = vmatprep.subr.mxu0 0.0
    %1716 = vmatpush1.msra.mxu0 0.0
    %1717 = vmatprep.subr.mxu0 0.0
    %1718 = vmatpush1.msra.mxu0 0.0
    %1719 = vmatprep.subr.mxu0 0.0
    %1720 = vmatpush1.msra.mxu0 0.0
    %1721 = vmatprep.subr.mxu0 0.0
    %1722 = vmatpush1.msra.mxu0 0.0
    %1723 = vmatprep.subr.mxu0 0.0
    %1724 = vmatpush1.msra.mxu0 0.0
    %1725 = vmatprep.subr.mxu0 0.0
    %1726 = vmatpush1.msra.mxu0 0.0
    %1727 = vmatprep.subr.mxu0 0.0
    %1728 = vmatpush1.msra.mxu0 %v1654
    %1729 = vmatprep.subr.mxu0 0.0
    %1730 = vmatpush1.msra.mxu0 %v1653
    %1731 = vmatprep.subr.mxu0 0.0
    %1732 = vmatpush1.msra.mxu0 %v1652
    %1733 = vmatprep.subr.mxu0 0.0
    %1734 = vmatpush1.msra.mxu0 %v1651
    %1735 = vmatprep.subr.mxu0 0.0
    %1736 = vmatpush2.msra.mxu0 0.0
    %1737 = vmatprep.subr.mxu0 0.0
    %1738 = vmatpush2.msra.mxu0 0.0
    %1739 = vmatprep.subr.mxu0 0.0
    %1740 = vmatpush2.msra.mxu0 0.0
    %1741 = vmatprep.subr.mxu0 0.0
    %1742 = vmatpush2.msra.mxu0 0.0
    %1743 = vmatprep.subr.mxu0 0.0
    %1744 = vmatpush2.msra.mxu0 0.0
    %1745 = vmatprep.subr.mxu0 0.0
    %1746 = vmatpush2.msra.mxu0 0.0
    %1747 = vmatprep.subr.mxu0 0.0
    %1748 = vmatpush2.msra.mxu0 0.0
    %1749 = vmatprep.subr.mxu0 0.0
    %1750 = vmatpush2.msra.mxu0 0.0
    %1751 = vmatprep.subr.mxu0 0.0
    %1752 = vmatpush2.msra.mxu0 0.0
    %1753 = vmatprep.subr.mxu0 0.0
    %1754 = vmatpush2.msra.mxu0 0.0
    %1755 = vmatprep.subr.mxu0 0.0
    %1756 = vmatpush2.msra.mxu0 0.0
    %1757 = vmatprep.subr.mxu0 0.0
    %1758 = vmatpush2.msra.mxu0 0.0
    %1759 = vmatprep.subr.mxu0 0.0
    %1760 = vmatpush2.msra.mxu0 0.0
    %1761 = vmatprep.subr.mxu0 0.0
    %1762 = vmatpush2.msra.mxu0 0.0
    %1763 = vmatprep.subr.mxu0 0.0
    %1764 = vmatpush2.msra.mxu0 0.0
    %1765 = vmatprep.subr.mxu0 0.0
    %1766 = vmatpush2.msra.mxu0 0.0
    %1767 = vmatprep.mubr.f32.mxu0 0.0
    %1768 = vmatmul.mubr.f32.gmra.mxu0 %v1656
    %v1769 = vpop.f32.mrf.mxu0
    %v1770 = vadd.f32 0.0, %v1769
    %v1771 = vpop.f32.mrf.mxu0
    %1772 = vmatprep.mubr.f32.mxu0 0.0
    %1773 = vmatmul.mubr.f32.gmra.mxu0 %v1659
    %v1774 = vpop.f32.mrf.mxu0
    %v1775 = vadd.f32 0.0, %v1774
    %v1776 = vpop.f32.mrf.mxu0
    %1777 = vmatprep.mubr.f32.mxu0 0.0
    %1778 = vmatmul.mubr.f32.gmra.mxu0 %v1662
    %v1779 = vpop.f32.mrf.mxu0
    %v1780 = vadd.f32 0.0, %v1779
    %v1781 = vpop.f32.mrf.mxu0
    %1782 = vmatprep.mubr.f32.mxu0 0.0
    %1783 = vmatmul.mubr.f32.gmra.mxu0 %v1665
    %v1784 = vpop.f32.mrf.mxu0
    %v1785 = vadd.f32 0.0, %v1784
    %v1786 = vpop.f32.mrf.mxu0
    %1787 = vmatprep.mubr.f32.mxu0 0.0
    %1788 = vmatmul.mubr.f32.gmra.mxu0 %v1668
    %v1789 = vpop.f32.mrf.mxu0
    %v1790 = vadd.f32 0.0, %v1789
    %v1791 = vpop.f32.mrf.mxu0
    %1792 = vmatprep.mubr.f32.mxu0 0.0
    %1793 = vmatmul.mubr.f32.gmra.mxu0 %v1671
    %v1794 = vpop.f32.mrf.mxu0
    %v1795 = vadd.f32 0.0, %v1794
    %v1796 = vpop.f32.mrf.mxu0
    %1797 = vmatprep.mubr.f32.mxu0 0.0
    %1798 = vmatmul.mubr.f32.gmra.mxu0 %v1674
    %v1799 = vpop.f32.mrf.mxu0
    %v1800 = vadd.f32 0.0, %v1799
    %v1801 = vpop.f32.mrf.mxu0
    %1802 = vmatprep.mubr.f32.mxu0 0.0
    %1803 = vmatmul.mubr.f32.gmra.mxu0 %v1677
    %v1804 = vpop.f32.mrf.mxu0
    %v1805 = vadd.f32 0.0, %v1804
    %v1806 = vpop.f32.mrf.mxu0
    %1807 = vmatprep.mubr.f32.mxu0 0.0
    %1808 = vmatmul.mubr.f32.gmra.mxu0 %v1680
    %v1809 = vpop.f32.mrf.mxu0
    %v1810 = vadd.f32 0.0, %v1809
    %v1811 = vpop.f32.mrf.mxu0
    %1812 = vmatprep.mubr.f32.mxu0 0.0
    %1813 = vmatmul.mubr.f32.gmra.mxu0 %v1683
    %v1814 = vpop.f32.mrf.mxu0
    %v1815 = vadd.f32 0.0, %v1814
    %v1816 = vpop.f32.mrf.mxu0
    %1817 = vmatprep.mubr.f32.mxu0 0.0
    %1818 = vmatmul.mubr.f32.gmra.mxu0 %v1686
    %v1819 = vpop.f32.mrf.mxu0
    %v1820 = vadd.f32 0.0, %v1819
    %v1821 = vpop.f32.mrf.mxu0
    %1822 = vmatprep.mubr.f32.mxu0 0.0
    %1823 = vmatmul.mubr.f32.gmra.mxu0 %v1689
    %v1824 = vpop.f32.mrf.mxu0
    %v1825 = vadd.f32 0.0, %v1824
    %v1826 = vpop.f32.mrf.mxu0
    %1827 = vmatprep.mubr.f32.mxu0 0.0
    %1828 = vmatmul.mubr.f32.gmra.mxu0 %v1692
    %v1829 = vpop.f32.mrf.mxu0
    %v1830 = vadd.f32 0.0, %v1829
    %v1831 = vpop.f32.mrf.mxu0
    %1832 = vmatprep.mubr.f32.mxu0 0.0
    %1833 = vmatmul.mubr.f32.gmra.mxu0 %v1695
    %v1834 = vpop.f32.mrf.mxu0
    %v1835 = vadd.f32 0.0, %v1834
    %v1836 = vpop.f32.mrf.mxu0
    %1837 = vmatprep.mubr.f32.mxu0 0.0
    %1838 = vmatmul.mubr.f32.gmra.mxu0 %v1698
    %v1839 = vpop.f32.mrf.mxu0
    %v1840 = vadd.f32 0.0, %v1839
    %v1841 = vpop.f32.mrf.mxu0
    %1842 = vmatprep.mubr.f32.mxu0 0.0
    %1843 = vmatmul.mubr.f32.gmra.mxu0 %v1701
    %v1844 = vpop.f32.mrf.mxu0
    %v1845 = vadd.f32 0.0, %v1844
    %v1846 = vpop.f32.mrf.mxu0
    %1847 = vdwg.mxu0
    %v1856 = vrot.slane %v1780, 7
    %vm1857 = vcmask 1041409
    %v1858 = vsel %vm1857, %v1856, %v1770
    %v1859 = vrot.slane %v1790, 6
    %vm1860 = vcmask 1042434
    %v1861 = vsel %vm1860, %v1859, %v1858
    %v1862 = vrot.slane %v1800, 5
    %vm1863 = vcmask 1043459
    %v1864 = vsel %vm1863, %v1862, %v1861
    %v1865 = vrot.slane %v1810, 4
    %vm1866 = vcmask 1044484
    %v1867 = vsel %vm1866, %v1865, %v1864
    %v1868 = vrot.slane %v1820, 3
    %vm1869 = vcmask 1045509
    %v1870 = vsel %vm1869, %v1868, %v1867
    %v1871 = vrot.slane %v1830, 2
    %vm1872 = vcmask 1046534
    %v1873 = vsel %vm1872, %v1871, %v1870
    %v1874 = vrot.slane %v1840, 1
    %vm1875 = vcmask 1047559
    %v1876 = vsel %vm1875, %v1874, %v1873
    %vm1878 = vcmask 64512
    %1879 = vst.msk [vmem:[#allocation3] sm:$0xff] %vm1878, %v1876
    %v1880 = vsel %vm1860, %v1856, %v1770
    %v1881 = vsel %vm1863, %v1859, %v1880
    %v1882 = vsel %vm1866, %v1862, %v1881
    %v1883 = vsel %vm1869, %v1865, %v1882
    %v1884 = vsel %vm1872, %v1868, %v1883
    %v1885 = vsel %vm1875, %v1871, %v1884
    %1886 = vrot.lane.b32.xlu0 %v1885, 8
    %v1887 = vpop.permute.xlu0 %1886
    %1888 = vrot.lane.b32.xlu0 %v1874, 8
    %v1889 = vpop.permute.xlu0 %1888
    %vm1892 = vcmask 130113
    %1893 = vst.msk [vmem:[#allocation3 - $0x1] sm:$0xfe] %vm1892, %v1887
    %vm1894 = vcmask 122944
    %1895 = vst.msk [vmem:[#allocation3 + $0x7] sm:$0x1] %vm1894, %v1889
    %v1896 = vsel %vm1863, %v1856, %v1770
    %v1897 = vsel %vm1866, %v1859, %v1896
    %v1898 = vsel %vm1869, %v1862, %v1897
    %v1899 = vsel %vm1872, %v1865, %v1898
    %v1900 = vsel %vm1875, %v1868, %v1899
    %v1901 = vsel %vm1857, %v1874, %v1871
    %1902 = vrot.lane.b32.xlu0 %v1900, 16
    %v1903 = vpop.permute.xlu0 %1902
    %1904 = vrot.lane.b32.xlu0 %v1901, 16
    %v1905 = vpop.permute.xlu0 %1904
    %vm1908 = vcmask 195714
    %1909 = vst.msk [vmem:[#allocation3 - $0x2] sm:$0xfc] %vm1908, %v1903
    %vm1910 = vcmask 189568
    %1911 = vst.msk [vmem:[#allocation3 + $0x6] sm:$0x3] %vm1910, %v1905
    %v1912 = vsel %vm1866, %v1856, %v1770
    %v1913 = vsel %vm1869, %v1859, %v1912
    %v1914 = vsel %vm1872, %v1862, %v1913
    %v1915 = vsel %vm1875, %v1865, %v1914
    %v1916 = vsel %vm1857, %v1871, %v1868
    %v1917 = vsel %vm1860, %v1874, %v1916
    %1918 = vrot.lane.b32.xlu0 %v1915, 24
    %v1919 = vpop.permute.xlu0 %1918
    %1920 = vrot.lane.b32.xlu0 %v1917, 24
    %v1921 = vpop.permute.xlu0 %1920
    %vm1924 = vcmask 261315
    %1925 = vst.msk [vmem:[#allocation3 - $0x3] sm:$0xf8] %vm1924, %v1919
    %vm1926 = vcmask 256192
    %1927 = vst.msk [vmem:[#allocation3 + $0x5] sm:$0x7] %vm1926, %v1921
    %v1928 = vsel %vm1869, %v1856, %v1770
    %v1929 = vsel %vm1872, %v1859, %v1928
    %v1930 = vsel %vm1875, %v1862, %v1929
    %v1931 = vsel %vm1857, %v1868, %v1865
    %v1932 = vsel %vm1860, %v1871, %v1931
    %v1933 = vsel %vm1863, %v1874, %v1932
    %1934 = vrot.lane.b32.xlu0 %v1930, 32
    %v1935 = vpop.permute.xlu0 %1934
    %1936 = vrot.lane.b32.xlu0 %v1933, 32
    %v1937 = vpop.permute.xlu0 %1936
    %vm1940 = vcmask 326916
    %1941 = vst.msk [vmem:[#allocation3 - $0x4] sm:$0xf0] %vm1940, %v1935
    %vm1942 = vcmask 322816
    %1943 = vst.msk [vmem:[#allocation3 + $0x4] sm:$0xf] %vm1942, %v1937
    %v1944 = vsel %vm1872, %v1856, %v1770
    %v1945 = vsel %vm1875, %v1859, %v1944
    %v1946 = vsel %vm1857, %v1865, %v1862
    %v1947 = vsel %vm1860, %v1868, %v1946
    %v1948 = vsel %vm1863, %v1871, %v1947
    %v1949 = vsel %vm1866, %v1874, %v1948
    %1950 = vrot.lane.b32.xlu0 %v1945, 40
    %v1951 = vpop.permute.xlu0 %1950
    %1952 = vrot.lane.b32.xlu0 %v1949, 40
    %v1953 = vpop.permute.xlu0 %1952
    %vm1956 = vcmask 392517
    %1957 = vst.msk [vmem:[#allocation3 - $0x5] sm:$0xe0] %vm1956, %v1951
    %vm1958 = vcmask 389440
    %1959 = vst.msk [vmem:[#allocation3 + $0x3] sm:$0x1f] %vm1958, %v1953
    %v1960 = vsel %vm1875, %v1856, %v1770
    %v1961 = vsel %vm1857, %v1862, %v1859
    %v1962 = vsel %vm1860, %v1865, %v1961
    %v1963 = vsel %vm1863, %v1868, %v1962
    %v1964 = vsel %vm1866, %v1871, %v1963
    %v1965 = vsel %vm1869, %v1874, %v1964
    %1966 = vrot.lane.b32.xlu0 %v1960, 48
    %v1967 = vpop.permute.xlu0 %1966
    %1968 = vrot.lane.b32.xlu0 %v1965, 48
    %v1969 = vpop.permute.xlu0 %1968
    %vm1972 = vcmask 458118
    %1973 = vst.msk [vmem:[#allocation3 - $0x6] sm:$0xc0] %vm1972, %v1967
    %vm1974 = vcmask 456064
    %1975 = vst.msk [vmem:[#allocation3 + $0x2] sm:$0x3f] %vm1974, %v1969
    %v1976 = vsel %vm1857, %v1859, %v1856
    %v1977 = vsel %vm1860, %v1862, %v1976
    %v1978 = vsel %vm1863, %v1865, %v1977
    %v1979 = vsel %vm1866, %v1868, %v1978
    %v1980 = vsel %vm1869, %v1871, %v1979
    %v1981 = vsel %vm1872, %v1874, %v1980
    %1982 = vrot.lane.b32.xlu0 %v1770, 56
    %v1983 = vpop.permute.xlu0 %1982
    %1984 = vrot.lane.b32.xlu0 %v1981, 56
    %v1985 = vpop.permute.xlu0 %1984
    %vm1988 = vcmask 523719
    %1989 = vst.msk [vmem:[#allocation3 - $0x7] sm:$0x80] %vm1988, %v1983
    %vm1990 = vcmask 522688
    %1991 = vst.msk [vmem:[#allocation3 + $0x1] sm:$0x7f] %vm1990, %v1985
    %v2000 = vrot.slane %v1785, 7
    %v2001 = vsel %vm1857, %v2000, %v1775
    %v2002 = vrot.slane %v1795, 6
    %v2003 = vsel %vm1860, %v2002, %v2001
    %v2004 = vrot.slane %v1805, 5
    %v2005 = vsel %vm1863, %v2004, %v2003
    %v2006 = vrot.slane %v1815, 4
    %v2007 = vsel %vm1866, %v2006, %v2005
    %v2008 = vrot.slane %v1825, 3
    %v2009 = vsel %vm1869, %v2008, %v2007
    %v2010 = vrot.slane %v1835, 2
    %v2011 = vsel %vm1872, %v2010, %v2009
    %v2012 = vrot.slane %v1845, 1
    %v2013 = vsel %vm1875, %v2012, %v2011
    %2014 = vrot.lane.b32.xlu0 %v2013, 64
    %v2015 = vpop.permute.xlu0 %2014
    %vm2017 = vcmask 589312
    %2018 = vst.msk [vmem:[#allocation3] sm:$0xff] %vm2017, %v2015
    %v2019 = vsel %vm1860, %v2000, %v1775
    %v2020 = vsel %vm1863, %v2002, %v2019
    %v2021 = vsel %vm1866, %v2004, %v2020
    %v2022 = vsel %vm1869, %v2006, %v2021
    %v2023 = vsel %vm1872, %v2008, %v2022
    %v2024 = vsel %vm1875, %v2010, %v2023
    %2025 = vrot.lane.b32.xlu0 %v2024, 72
    %v2026 = vpop.permute.xlu0 %2025
    %2027 = vrot.lane.b32.xlu0 %v2012, 72
    %v2028 = vpop.permute.xlu0 %2027
    %vm2031 = vcmask 654913
    %2032 = vst.msk [vmem:[#allocation3 - $0x1] sm:$0xfe] %vm2031, %v2026
    %vm2033 = vcmask 647744
    %2034 = vst.msk [vmem:[#allocation3 + $0x7] sm:$0x1] %vm2033, %v2028
    %v2035 = vsel %vm1863, %v2000, %v1775
    %v2036 = vsel %vm1866, %v2002, %v2035
    %v2037 = vsel %vm1869, %v2004, %v2036
    %v2038 = vsel %vm1872, %v2006, %v2037
    %v2039 = vsel %vm1875, %v2008, %v2038
    %v2040 = vsel %vm1857, %v2012, %v2010
    %2041 = vrot.lane.b32.xlu0 %v2039, 80
    %v2042 = vpop.permute.xlu0 %2041
    %2043 = vrot.lane.b32.xlu0 %v2040, 80
    %v2044 = vpop.permute.xlu0 %2043
    %vm2047 = vcmask 720514
    %2048 = vst.msk [vmem:[#allocation3 - $0x2] sm:$0xfc] %vm2047, %v2042
    %vm2049 = vcmask 714368
    %2050 = vst.msk [vmem:[#allocation3 + $0x6] sm:$0x3] %vm2049, %v2044
    %v2051 = vsel %vm1866, %v2000, %v1775
    %v2052 = vsel %vm1869, %v2002, %v2051
    %v2053 = vsel %vm1872, %v2004, %v2052
    %v2054 = vsel %vm1875, %v2006, %v2053
    %v2055 = vsel %vm1857, %v2010, %v2008
    %v2056 = vsel %vm1860, %v2012, %v2055
    %2057 = vrot.lane.b32.xlu0 %v2054, 88
    %v2058 = vpop.permute.xlu0 %2057
    %2059 = vrot.lane.b32.xlu0 %v2056, 88
    %v2060 = vpop.permute.xlu0 %2059
    %vm2063 = vcmask 786115
    %2064 = vst.msk [vmem:[#allocation3 - $0x3] sm:$0xf8] %vm2063, %v2058
    %vm2065 = vcmask 780992
    %2066 = vst.msk [vmem:[#allocation3 + $0x5] sm:$0x7] %vm2065, %v2060
    %v2067 = vsel %vm1869, %v2000, %v1775
    %v2068 = vsel %vm1872, %v2002, %v2067
    %v2069 = vsel %vm1875, %v2004, %v2068
    %v2070 = vsel %vm1857, %v2008, %v2006
    %v2071 = vsel %vm1860, %v2010, %v2070
    %v2072 = vsel %vm1863, %v2012, %v2071
    %2073 = vrot.lane.b32.xlu0 %v2069, 96
    %v2074 = vpop.permute.xlu0 %2073
    %2075 = vrot.lane.b32.xlu0 %v2072, 96
    %v2076 = vpop.permute.xlu0 %2075
    %vm2079 = vcmask 851716
    %2080 = vst.msk [vmem:[#allocation3 - $0x4] sm:$0xf0] %vm2079, %v2074
    %vm2081 = vcmask 847616
    %2082 = vst.msk [vmem:[#allocation3 + $0x4] sm:$0xf] %vm2081, %v2076
    %v2083 = vsel %vm1872, %v2000, %v1775
    %v2084 = vsel %vm1875, %v2002, %v2083
    %v2085 = vsel %vm1857, %v2006, %v2004
    %v2086 = vsel %vm1860, %v2008, %v2085
    %v2087 = vsel %vm1863, %v2010, %v2086
    %v2088 = vsel %vm1866, %v2012, %v2087
    %2089 = vrot.lane.b32.xlu0 %v2084, 104
    %v2090 = vpop.permute.xlu0 %2089
    %2091 = vrot.lane.b32.xlu0 %v2088, 104
    %v2092 = vpop.permute.xlu0 %2091
    %vm2095 = vcmask 917317
    %2096 = vst.msk [vmem:[#allocation3 - $0x5] sm:$0xe0] %vm2095, %v2090
    %vm2097 = vcmask 914240
    %2098 = vst.msk [vmem:[#allocation3 + $0x3] sm:$0x1f] %vm2097, %v2092
    %v2099 = vsel %vm1875, %v2000, %v1775
    %v2100 = vsel %vm1857, %v2004, %v2002
    %v2101 = vsel %vm1860, %v2006, %v2100
    %v2102 = vsel %vm1863, %v2008, %v2101
    %v2103 = vsel %vm1866, %v2010, %v2102
    %v2104 = vsel %vm1869, %v2012, %v2103
    %2105 = vrot.lane.b32.xlu0 %v2099, 112
    %v2106 = vpop.permute.xlu0 %2105
    %2107 = vrot.lane.b32.xlu0 %v2104, 112
    %v2108 = vpop.permute.xlu0 %2107
    %vm2111 = vcmask 982918
    %2112 = vst.msk [vmem:[#allocation3 - $0x6] sm:$0xc0] %vm2111, %v2106
    %vm2113 = vcmask 980864
    %2114 = vst.msk [vmem:[#allocation3 + $0x2] sm:$0x3f] %vm2113, %v2108
    %v2115 = vsel %vm1857, %v2002, %v2000
    %v2116 = vsel %vm1860, %v2004, %v2115
    %v2117 = vsel %vm1863, %v2006, %v2116
    %v2118 = vsel %vm1866, %v2008, %v2117
    %v2119 = vsel %vm1869, %v2010, %v2118
    %v2120 = vsel %vm1872, %v2012, %v2119
    %2121 = vrot.lane.b32.xlu0 %v1775, 120
    %v2122 = vpop.permute.xlu0 %2121
    %2123 = vrot.lane.b32.xlu0 %v2120, 120
    %v2124 = vpop.permute.xlu0 %2123
    %vm2127 = vcmask 1048519
    %2128 = vst.msk [vmem:[#allocation3 - $0x7] sm:$0x80] %vm2127, %v2122
    %vm2129 = vcmask 1047488
    %2130 = vst.msk [vmem:[#allocation3 + $0x1] sm:$0x7f] %vm2129, %v2124
    %v2131 = vld [vmem:[#allocation3] sm:$0xff]
    %v2133 = vlaneseq
    %v2134 = vshrl.u32 %v2133, 7
    %v2135 = vsub.s32 0, %v2134
    %v2136 = vrot.slane %v163, %v2135
    %v2137 = vlaneseq
    %v2138 = vshrl.u32 %v2137, 7
    %v2139 = vsub.s32 1, %v2138
    %v2140 = vrot.slane %v163, %v2139
    %2141 = vrot.lane.b32.xlu0 %v2136, 64
    %v2142 = vpop.permute.xlu0 %2141
    %2143 = vrot.lane.b32.xlu0 %v2140, 64
    %v2144 = vpop.permute.xlu0 %2143
    %vm2145 = vcmask 523264
    %v2146 = vsel %vm2145, %v2142, %v2144
    %v2148 = vadd.f32 %v2131, %v2146
    %v2149 = vmin.f32 %v2148, 20.0
    %v2150 = vmul.f32 %v2149, 1.442695
    %v2151 = vpow.pop %v2150
    %v2152 = vadd.f32 %v2151, 2.0
    %v2153 = vmul.f32 %v2151, %v2152
    %v2154 = vadd.f32 %v2153, 2.0
    %v2155 = vrcp.pop %v2154
    %v2156 = vmul.f32 %v2153, %v2155
    %v2157 = vmul.f32 %v2148, %v2156
    %vm2158 = vcmp.gt.f32.partialorder %v2148, 20.0
    %v2159 = vsel %vm2158, %v2148, %v2157
    %v2160 = vld [vmem:[%s5] sm:$0xff]
    %v2161 = vld [vmem:[%s5 + $0x8] sm:$0xff]
    %v2162 = vld [vmem:[%s5 + $0x10] sm:$0xff]
    %v2163 = vld [vmem:[%s5 + $0x18] sm:$0xff]
    %v2164 = vld [vmem:[%s5 + $0x20] sm:$0xff]
    %v2165 = vld [vmem:[%s5 + $0x28] sm:$0xff]
    %v2166 = vld [vmem:[%s5 + $0x30] sm:$0xff]
    %v2167 = vld [vmem:[%s5 + $0x38] sm:$0xff]
    %v2168 = vld [vmem:[%s5 + $0x40] sm:$0xff]
    %v2169 = vld [vmem:[%s5 + $0x48] sm:$0xff]
    %v2170 = vld [vmem:[%s5 + $0x50] sm:$0xff]
    %v2171 = vld [vmem:[%s5 + $0x58] sm:$0xff]
    %v2172 = vld [vmem:[%s5 + $0x60] sm:$0xff]
    %v2173 = vld [vmem:[%s5 + $0x68] sm:$0xff]
    %v2174 = vld [vmem:[%s5 + $0x70] sm:$0xff]
    %v2175 = vld [vmem:[%s5 + $0x78] sm:$0xff]
    %v2177 = vlaneseq
    %v2178 = vshrl.u32 %v2177, 7
    %v2179 = vsub.s32 0, %v2178
    %v2180 = vrot.slane %v164, %v2179
    %2181 = vrot.lane.b32.xlu0 %v2180, 64
    %v2182 = vpop.permute.xlu0 %2181
    %2184 = vmatprep.subr.mxu0 0.0
    %2185 = vmatpush1.msra.mxu0 %v2175
    %2186 = vmatprep.subr.mxu0 0.0
    %2187 = vmatpush1.msra.mxu0 %v2174
    %2188 = vmatprep.subr.mxu0 0.0
    %2189 = vmatpush1.msra.mxu0 %v2173
    %2190 = vmatprep.subr.mxu0 0.0
    %2191 = vmatpush1.msra.mxu0 %v2172
    %2192 = vmatprep.subr.mxu0 0.0
    %2193 = vmatpush1.msra.mxu0 %v2171
    %2194 = vmatprep.subr.mxu0 0.0
    %2195 = vmatpush1.msra.mxu0 %v2170
    %2196 = vmatprep.subr.mxu0 0.0
    %2197 = vmatpush1.msra.mxu0 %v2169
    %2198 = vmatprep.subr.mxu0 0.0
    %2199 = vmatpush1.msra.mxu0 %v2168
    %2200 = vmatprep.subr.mxu0 0.0
    %2201 = vmatpush1.msra.mxu0 %v2167
    %2202 = vmatprep.subr.mxu0 0.0
    %2203 = vmatpush1.msra.mxu0 %v2166
    %2204 = vmatprep.subr.mxu0 0.0
    %2205 = vmatpush1.msra.mxu0 %v2165
    %2206 = vmatprep.subr.mxu0 0.0
    %2207 = vmatpush1.msra.mxu0 %v2164
    %2208 = vmatprep.subr.mxu0 0.0
    %2209 = vmatpush1.msra.mxu0 %v2163
    %2210 = vmatprep.subr.mxu0 0.0
    %2211 = vmatpush1.msra.mxu0 %v2162
    %2212 = vmatprep.subr.mxu0 0.0
    %2213 = vmatpush1.msra.mxu0 %v2161
    %2214 = vmatprep.subr.mxu0 0.0
    %2215 = vmatpush1.msra.mxu0 %v2160
    %2216 = vmatprep.subr.mxu0 0.0
    %2217 = vmatpush2.msra.mxu0 0.0
    %2218 = vmatprep.subr.mxu0 0.0
    %2219 = vmatpush2.msra.mxu0 0.0
    %2220 = vmatprep.subr.mxu0 0.0
    %2221 = vmatpush2.msra.mxu0 0.0
    %2222 = vmatprep.subr.mxu0 0.0
    %2223 = vmatpush2.msra.mxu0 0.0
    %2224 = vmatprep.subr.mxu0 0.0
    %2225 = vmatpush2.msra.mxu0 0.0
    %2226 = vmatprep.subr.mxu0 0.0
    %2227 = vmatpush2.msra.mxu0 0.0
    %2228 = vmatprep.subr.mxu0 0.0
    %2229 = vmatpush2.msra.mxu0 0.0
    %2230 = vmatprep.subr.mxu0 0.0
    %2231 = vmatpush2.msra.mxu0 0.0
    %2232 = vmatprep.subr.mxu0 0.0
    %2233 = vmatpush2.msra.mxu0 0.0
    %2234 = vmatprep.subr.mxu0 0.0
    %2235 = vmatpush2.msra.mxu0 0.0
    %2236 = vmatprep.subr.mxu0 0.0
    %2237 = vmatpush2.msra.mxu0 0.0
    %2238 = vmatprep.subr.mxu0 0.0
    %2239 = vmatpush2.msra.mxu0 0.0
    %2240 = vmatprep.subr.mxu0 0.0
    %2241 = vmatpush2.msra.mxu0 0.0
    %2242 = vmatprep.subr.mxu0 0.0
    %2243 = vmatpush2.msra.mxu0 0.0
    %2244 = vmatprep.subr.mxu0 0.0
    %2245 = vmatpush2.msra.mxu0 0.0
    %2246 = vmatprep.subr.mxu0 0.0
    %2247 = vmatpush2.msra.mxu0 0.0
    %2248 = vmatprep.mubr.f32.mxu0 0.0
    %2249 = vmatmul.mubr.f32.gmra.mxu0 %v2159
    %v2250 = vpop.f32.mrf.mxu0
    %v2251 = vadd.f32 %v2182, %v2250
    %v2252 = vpop.f32.mrf.mxu0
    %2253 = vdwg.mxu0
    %2254 = vst.msk [vmem:[#allocation4] sm:$0xff] %vm45, %v2251
    // Predicated region
    $region30: #{tpu_custom_call.1} parent=1 // pred_check
      _
    $region31: #{tpu_custom_call.1} parent=1 // pred_check_branch
      %2256 = sbr.rel (0) target = $region33
    $region32: #{tpu_custom_call.1} parent=1 // pred_region
      %s2258 = ssub.s32 128, 128
      %2259 = vsyncadd [#allocation5], %s2258
      %s2261 = sshll.u32 [#allocation4], 4
      %s2262 = int_to_ptr.vmem [resolvable:$true] %s2261
      %2264 = dma.vmem_to_hbm [thread:$0]  %s2262, 128, %s7, [#allocation5]
    $region33: #{tpu_custom_call.1} parent=1 // pred_fallthru
      _
    // Predicated region
    $region34: #{tpu_custom_call.1} parent=1 // pred_check
      _
    $region35: #{tpu_custom_call.1} parent=1 // pred_check_branch
      %2266 = sbr.rel (0) target = $region37
    $region36: #{tpu_custom_call.1} parent=1 // pred_region
      %2267 = dma.done [#allocation5], 128
    $region37: #{tpu_custom_call.1} parent=1 // pred_fallthru
      _
    %2268 = vsyncpa [#allocation5], 1

</llo_original>
